<compile_context>
chip_gen: v7x
topology: tpu7x:2x2x1
jax: 0.10.0
libtpu: 0.0.40
codegen_flags: <defaults>
</compile_context>

<pallas_src>
import numpy as np
import jax
import jax.numpy as jnp
from jax import lax
from jax.experimental import pallas as pl
from jax.experimental.pallas import tpu as pltpu

# ----------------------------- problem sizes --------------------------------
DIM_NODE = 16          # dim_node
DIM_EDGE = 8           # dim_edge
N_CENTERS_DIST = 8     # n_centers_dist
N_CENTERS_ANGLE = 8    # n_centers_angle
DIM_HIDDEN = 32        # dim_hidden
VEC_DIM = 3            # edge direction vectors
VEC_PAD = 8            # zero-padded vec lanes (aligned contraction dim)
N_NODES = 8
N_EDGES = 2 * N_NODES  # ring both ways
N_GRAPHS = 4           # batched graphs / timesteps

KEEP = 0.8             # m <- 0.8*m + 0.2*m_tmp
EPS = 1e-12

F_IN = DIM_NODE + N_CENTERS_DIST + DIM_EDGE      # 32  ([m | dist | e] per edge)
EH   = N_EDGES * DIM_HIDDEN                      # 512
EDN  = N_EDGES * DIM_NODE                        # 256
ENA  = N_EDGES * N_CENTERS_ANGLE                 # 128
NDN  = N_NODES * DIM_NODE                        # 128

# -------- static parameter slab layout (single [SLAB_ROWS, 512] input) -------
SLAB_COLS = EH                     # 512 lanes
R_WA   = 0                         # [ENA, EH]  block-diag fc_angle
R_WC1  = R_WA + ENA                # [EH, EDN]  block-diag fc_combine (msg half)
R_INC  = R_WC1 + EH                # [EDN, NDN] incidence selector (mailbox reduce)
R_GRP  = R_INC + EDN               # [NDN, NDN] per-node group-sum (for the L2 norm)
R_REP  = R_GRP + NDN               # [E, ENA]   cos -> per-RBF-center replicate
R_MASK = R_REP + N_EDGES           # [E, EDN]   (1-KEEP) * predecessor mask
R_WPM  = R_MASK + N_EDGES          # [F, EH]    lane-tiled fc_msg
R_WPD  = R_WPM + F_IN              # [F, EH]    lane-tiled fc_dist
R_WQE  = R_WPD + F_IN              # [F, EDN]   lane-tiled fc_edge @ Wc2
R_BA   = R_WQE + F_IN              # [1, EH]
R_CEN  = R_BA + 8                  # [1, ENA]
R_KEEP = R_CEN + 8                 # [1, EDN]   1 - (1-KEEP)*gate
R_BPM  = R_KEEP + 8                # [1, EH]
R_BPD  = R_BPM + 8                 # [1, EH]
R_BQE  = R_BPD + 8                 # [1, EDN]
SLAB_ROWS = R_BQE + 8
assert all(r % 8 == 0 for r in
           (R_WA, R_WC1, R_INC, R_GRP, R_REP, R_MASK, R_WPM, R_WPD, R_WQE,
            R_BA, R_CEN, R_KEEP, R_BPM, R_BPD, R_BQE, SLAB_ROWS))


# ----------------------------- Pallas kernel ---------------------------------
def spat_conv_kernel(slab_ref, x_ref, mflat_ref, vec_ref, h_ref, mnew_ref):
    f32 = jnp.float32
    dot = lambda a, b: jnp.dot(a, b, preferred_element_type=f32)

    # static parameter slab (one DMA), sliced at static aligned offsets
    w_angle_bd = slab_ref[R_WA:R_WA + ENA, :]                 # [ENA, EH]
    w_c1_bd    = slab_ref[R_WC1:R_WC1 + EH, :EDN]             # [EH, EDN]
    inc_sel    = slab_ref[R_INC:R_INC + EDN, :NDN]            # [EDN, NDN]
    group_sum  = slab_ref[R_GRP:R_GRP + NDN, :NDN]            # [NDN, NDN]
    rep        = slab_ref[R_REP:R_REP + N_EDGES, :ENA]        # [E, ENA]
    mask_s     = slab_ref[R_MASK:R_MASK + N_EDGES, :EDN]      # [E, EDN], already * (1-KEEP)
    w_pm       = slab_ref[R_WPM:R_WPM + F_IN, :]              # [F, EH]
    w_pd       = slab_ref[R_WPD:R_WPD + F_IN, :]              # [F, EH]
    w_qe       = slab_ref[R_WQE:R_WQE + F_IN, :EDN]           # [F, EDN]
    b_a        = slab_ref[R_BA:R_BA + 1, :]                   # [1, EH]
    centers    = slab_ref[R_CEN:R_CEN + 1, :ENA]              # [1, ENA]
    keep       = slab_ref[R_KEEP:R_KEEP + 1, :EDN]            # [1, EDN]
    b_pm       = slab_ref[R_BPM:R_BPM + 1, :]                 # [1, EH]
    b_pd       = slab_ref[R_BPD:R_BPD + 1, :]                 # [1, EH]
    b_qe       = slab_ref[R_BQE:R_BQE + 1, :EDN]              # [1, EDN]

    x   = x_ref[...]          # [E, F]     rows j = sending (predecessor) edge
    vec = vec_ref[...]        # [E, 8]     zero-padded direction vectors
    m0  = mflat_ref[...]      # [1, EDN]   pre-update messages, flat i*Dn+d layout

    # pair geometry (lane-dense): cos[j, i] = vec_j . vec_i, replicated per RBF center
    cos = lax.dot_general(vec, vec, (((1,), (1,)), ((), ())),
                          preferred_element_type=f32)          # [E, E]
    rbf = jnp.exp(-0.5 * (dot(cos, rep) - centers) ** 2)       # [E, ENA]   angles_rbf
    p_angle = dot(rbf, w_angle_bd) + b_a                       # [E, EH]    fc_angle

    # per-edge projections, already tiled across receiving-edge lane groups
    p_msg  = dot(x, w_pm) + b_pm                               # [E, EH]    fc_msg(m_j)
    p_dist = dot(x, w_pd) + b_pd                               # [E, EH]    fc_dist(d_j)
    q_edge = dot(x, w_qe) + b_qe                               # [E, EDN]   fc_edge(e_j)@Wc2

    # interaction * combine (block-diag MXU) + tanh, all lane-dense
    z = dot(p_msg * p_dist * p_angle, w_c1_bd) + q_edge        # [E, EDN]
    t = jnp.tanh(z)

    # masked predecessor sum (mask pre-scaled by 1-KEEP) + degree-gated blend
    m_upd = jnp.sum(mask_s * t, axis=0, keepdims=True)         # [1, EDN]
    m_new = keep * m0 + m_upd                                  # [1, EDN]
    mnew_ref[...] = m_new                                      # 256-lane store

    # node mailbox reduce + per-node L2 normalize (rsqrt on EUP, eps-safe)
    h = dot(m_new, inc_sel)                                    # [1, NDN]
    ssq = dot(h * h, group_sum)                                # per-node sumsq, broadcast
    h_ref[...] = h * lax.rsqrt(ssq + EPS)                      # 128-lane store


# ----------------------------- forward wrapper --------------------------------
@jax.jit
def spat_conv_forward(slab, x, m_flat, vec):
    G = x.shape[0]
    f32 = jnp.float32
    return pl.pallas_call(
        spat_conv_kernel,
        out_shape=(jax.ShapeDtypeStruct((G, 1, NDN), f32),
                   jax.ShapeDtypeStruct((G, 1, EDN), f32)),
        grid=(G,),
        in_specs=[
            pl.BlockSpec((SLAB_ROWS, SLAB_COLS), lambda g: (0, 0)),     # static slab (resident)
            pl.BlockSpec((None, N_EDGES, F_IN), lambda g: (g, 0, 0)),   # [m | dist | e]
            pl.BlockSpec((None, 1, EDN), lambda g: (g, 0, 0)),          # flat m
            pl.BlockSpec((None, N_EDGES, VEC_PAD), lambda g: (g, 0, 0)),
        ],
        out_specs=(pl.BlockSpec((None, 1, NDN), lambda g: (g, 0, 0)),
                   pl.BlockSpec((None, 1, EDN), lambda g: (g, 0, 0))),
        compiler_params=pltpu.CompilerParams(dimension_semantics=("parallel",)),
    )(slab, x, m_flat, vec)


# ------------------- one-time (host) static slab construction ------------------
def build_static_slab(params, mask, inc):
    f32 = np.float32
    E, N = N_EDGES, N_NODES
    Dn, H, Nca, Ncd = DIM_NODE, DIM_HIDDEN, N_CENTERS_ANGLE, N_CENTERS_DIST

    Wm, bm = np.asarray(params["w_msg"], f32), np.asarray(params["b_msg"], f32)
    Wd, bd = np.asarray(params["w_dist"], f32), np.asarray(params["b_dist"], f32)
    Wa, ba = np.asarray(params["w_angle"], f32), np.asarray(params["b_angle"], f32)
    We, be = np.asarray(params["w_edge"], f32), np.asarray(params["b_edge"], f32)
    Wc1, Wc2 = np.asarray(params["w_c1"], f32), np.asarray(params["w_c2"], f32)
    centers = np.asarray(params["centers"], f32)
    mask, inc = np.asarray(mask, f32), np.asarray(inc, f32)

    # fold fc_combine's edge half into the edge projection (affine composition)
    Wqe, bqe = We @ Wc2, be @ Wc2

    Wm_pad = np.zeros((F_IN, H), f32); Wm_pad[:Dn] = Wm
    Wd_pad = np.zeros((F_IN, H), f32); Wd_pad[Dn:Dn + Ncd] = Wd
    Wqe_pad = np.zeros((F_IN, Dn), f32); Wqe_pad[Dn + Ncd:] = Wqe

    gate = (mask.sum(axis=1) > 0).astype(f32)                 # [E]

    slab = np.zeros((SLAB_ROWS, SLAB_COLS), f32)
    slab[R_WA:R_WA + ENA, :EH]        = np.kron(np.eye(E, dtype=f32), Wa)
    slab[R_WC1:R_WC1 + EH, :EDN]      = np.kron(np.eye(E, dtype=f32), Wc1)
    slab[R_INC:R_INC + EDN, :NDN]     = np.kron(inc.T, np.eye(Dn, dtype=f32))
    slab[R_GRP:R_GRP + NDN, :NDN]     = np.kron(np.eye(N, dtype=f32), np.ones((Dn, Dn), f32))
    slab[R_REP:R_REP + E, :ENA]       = np.kron(np.eye(E, dtype=f32), np.ones((1, Nca), f32))
    slab[R_MASK:R_MASK + E, :EDN]     = (1.0 - KEEP) * np.kron(mask.T, np.ones((1, Dn), f32))
    slab[R_WPM:R_WPM + F_IN, :EH]     = np.tile(Wm_pad, (1, E))
    slab[R_WPD:R_WPD + F_IN, :EH]     = np.tile(Wd_pad, (1, E))
    slab[R_WQE:R_WQE + F_IN, :EDN]    = np.tile(Wqe_pad, (1, E))
    slab[R_BA, :EH]                   = np.tile(ba, (1, E))[0]
    slab[R_CEN, :ENA]                 = np.tile(centers, (1, E))[0]
    slab[R_KEEP, :EDN]                = np.repeat(1.0 - (1.0 - KEEP) * gate, Dn)
    slab[R_BPM, :EH]                  = np.tile(bm, (1, E))[0]
    slab[R_BPD, :EH]                  = np.tile(bd, (1, E))[0]
    slab[R_BQE, :EDN]                 = np.tile(bqe, (1, E))[0]
    return slab


# ----------------------------- params & graph --------------------------------
def init_params(key):
    def linear(k, fan_in, fan_out):
        k1, k2 = jax.random.split(k)
        bound = 1.0 / float(np.sqrt(fan_in))
        w = jax.random.uniform(k1, (fan_in, fan_out), jnp.float32, -bound, bound)
        b = jax.random.uniform(k2, (1, fan_out), jnp.float32, -bound, bound)
        return w, b

    keys = jax.random.split(key, 5)
    w_msg, b_msg = linear(keys[0], DIM_NODE, DIM_HIDDEN)
    w_dist, b_dist = linear(keys[1], N_CENTERS_DIST, DIM_HIDDEN)
    w_angle, b_angle = linear(keys[2], N_CENTERS_ANGLE, DIM_HIDDEN)
    w_edge, b_edge = linear(keys[3], DIM_EDGE, DIM_HIDDEN)
    bound = 1.0 / float(np.sqrt(2 * DIM_HIDDEN))
    w_comb = jax.random.uniform(keys[4], (2 * DIM_HIDDEN, DIM_NODE), jnp.float32, -bound, bound)
    centers = jnp.linspace(-1.0, 1.0, N_CENTERS_ANGLE, dtype=jnp.float32).reshape(1, -1)
    return dict(w_msg=w_msg, b_msg=b_msg, w_dist=w_dist, b_dist=b_dist,
                w_angle=w_angle, b_angle=b_angle, w_edge=w_edge, b_edge=b_edge,
                w_c1=w_comb[:DIM_HIDDEN], w_c2=w_comb[DIM_HIDDEN:], centers=centers)


def build_graph():
    # directed ring both ways over N_NODES nodes -> every node has in-degree 2
    src = [i for i in range(N_NODES)] + [(i + 1) % N_NODES for i in range(N_NODES)]
    dst = [(i + 1) % N_NODES for i in range(N_NODES)] + [i for i in range(N_NODES)]
    src, dst = np.array(src), np.array(dst)
    # mask[i, j] = 1 iff edge j = (w, v) is a predecessor edge of edge i = (v, u), w != u
    mask = ((dst[None, :] == src[:, None]) & (src[None, :] != dst[:, None])).astype(np.float32)
    # incidence[n, j] = 1 iff edge j is delivered to node n (dst[j] == n)
    inc = (dst[None, :] == np.arange(N_NODES)[:, None]).astype(np.float32)
    return src, dst, mask, inc


# ----------------------------- pure-numpy reference ---------------------------
def reference(m, dist, efeat, vec, src, dst, p):
    f64 = np.float64
    Wm, bm = np.asarray(p["w_msg"], f64), np.asarray(p["b_msg"], f64)
    Wd, bd = np.asarray(p["w_dist"], f64), np.asarray(p["b_dist"], f64)
    Wa, ba = np.asarray(p["w_angle"], f64), np.asarray(p["b_angle"], f64)
    We, be = np.asarray(p["w_edge"], f64), np.asarray(p["b_edge"], f64)
    Wc1, Wc2 = np.asarray(p["w_c1"], f64), np.asarray(p["w_c2"], f64)
    centers = np.asarray(p["centers"], f64)[0]
    E = m.shape[0]
    m0 = np.asarray(m, f64)
    m_new = m0.copy()
    for i in range(E):
        v, u = src[i], dst[i]
        wv = [j for j in range(E) if dst[j] == v and src[j] != u]
        if not wv:
            continue
        cos = (vec[wv] * vec[i]).sum(axis=1)
        a = np.exp(-0.5 * (cos[:, None] - centers[None, :]) ** 2)
        inter = (m0[wv] @ Wm + bm) * (dist[wv] @ Wd + bd) * (a @ Wa + ba)
        out = np.tanh(inter @ Wc1 + (efeat[wv] @ We + be) @ Wc2)
        m_new[i] = KEEP * m0[i] + (1.0 - KEEP) * out.sum(axis=0)
    h = np.zeros((N_NODES, DIM_NODE))
    for j in range(E):
        h[dst[j]] += m_new[j]
    h = h / np.linalg.norm(h, axis=1, keepdims=True)
    return h, m_new


# ----------------------------- main -------------------------------------------
if __name__ == "__main__":
    key = jax.random.PRNGKey(0)
    kp, kd = jax.random.split(key)
    params = init_params(kp)

    src, dst, mask_np, inc_np = build_graph()
    G, E = N_GRAPHS, N_EDGES

    # one-time static setup: pack all graph/param-static tensors into a single slab
    slab = jnp.asarray(build_static_slab(params, mask_np, inc_np))

    dk = jax.random.split(kd, 4)
    m = jax.random.normal(dk[0], (G, E, DIM_NODE), jnp.float32)              # edges.data['m']
    dist = jax.random.uniform(dk[1], (G, E, N_CENTERS_DIST), jnp.float32)    # edges.data['dist']
    efeat = jax.random.normal(dk[2], (G, E, DIM_EDGE), jnp.float32)          # edges.data['h']
    vec = jax.random.normal(dk[3], (G, E, VEC_DIM), jnp.float32)             # edges.data['vec']

    # cheap per-call layout prep (row-major reshapes / concat only)
    x = jnp.concatenate([m, dist, efeat], axis=-1)                           # [G, E, F]
    m_flat = m.reshape(G, 1, EDN)                                            # [G, 1, E*Dn]
    vec_pad = jnp.concatenate(
        [vec, jnp.zeros((G, E, VEC_PAD - VEC_DIM), jnp.float32)], axis=-1)   # [G, E, 8]

    h_flat, m_new_flat = spat_conv_forward(slab, x, m_flat, vec_pad)
    h_flat, m_new_flat = jax.block_until_ready((h_flat, m_new_flat))

    h_out = np.asarray(h_flat).reshape(G, N_NODES, DIM_NODE)
    m_out = np.asarray(m_new_flat).reshape(G, E, DIM_NODE)

    for g in range(G):
        h_ref, m_ref = reference(np.asarray(m[g]), np.asarray(dist[g]),
                                 np.asarray(efeat[g]), np.asarray(vec[g]),
                                 src, dst, params)
        assert np.allclose(h_out[g], h_ref, rtol=1e-4, atol=1e-4), f"h mismatch graph {g}"
        assert np.allclose(m_out[g], m_ref, rtol=1e-4, atol=1e-4), f"m mismatch graph {g}"
    print("KERNEL_OK")
</pallas_src>

<mosaic_0001>
module attributes {stable_mosaic.version = 11 : i64} {
  func.func @spat_conv_kernel(%arg0: i32, %arg1: memref<1200x512xf32, #tpu.memory_space<vmem>>, %arg2: memref<1x16x32xf32, #tpu.memory_space<vmem>>, %arg3: memref<1x1x256xf32, #tpu.memory_space<vmem>>, %arg4: memref<1x16x8xf32, #tpu.memory_space<vmem>>, %arg5: memref<1x1x128xf32, #tpu.memory_space<vmem>>, %arg6: memref<1x1x256xf32, #tpu.memory_space<vmem>>) attributes {dimension_semantics = [#tpu.dimension_semantics<parallel>], iteration_bounds = array<i64: 4>, scalar_prefetch = 0 : i64, scratch_operands = 0 : i64, tpu.core_type = #tpu.core_type<tc>, window_params = [{pipeline_mode = #tpu.pipeline_mode<synchronous>, transform_indices = @transform_0, window_bounds = array<i64: 1200, 512>}, {transform_indices = @transform_1, window_bounds = array<i64: 1, 16, 32>}, {transform_indices = @transform_2, window_bounds = array<i64: 1, 1, 256>}, {transform_indices = @transform_3, window_bounds = array<i64: 1, 16, 8>}, {transform_indices = @transform_4, window_bounds = array<i64: 1, 1, 128>}, {transform_indices = @transform_5, window_bounds = array<i64: 1, 1, 256>}]} {
    %c0 = arith.constant 0 : index
    %c0_0 = arith.constant 0 : index
    %0 = vector.load %arg1[%c0, %c0_0] : memref<1200x512xf32, #tpu.memory_space<vmem>>, vector<128x512xf32>
    %c128 = arith.constant 128 : index
    %c0_1 = arith.constant 0 : index
    %1 = vector.load %arg1[%c128, %c0_1] : memref<1200x512xf32, #tpu.memory_space<vmem>>, vector<512x256xf32>
    %c640 = arith.constant 640 : index
    %c0_2 = arith.constant 0 : index
    %2 = vector.load %arg1[%c640, %c0_2] : memref<1200x512xf32, #tpu.memory_space<vmem>>, vector<256x128xf32>
    %c896 = arith.constant 896 : index
    %c0_3 = arith.constant 0 : index
    %3 = vector.load %arg1[%c896, %c0_3] : memref<1200x512xf32, #tpu.memory_space<vmem>>, vector<128x128xf32>
    %c1024 = arith.constant 1024 : index
    %c0_4 = arith.constant 0 : index
    %4 = vector.load %arg1[%c1024, %c0_4] : memref<1200x512xf32, #tpu.memory_space<vmem>>, vector<16x128xf32>
    %c1040 = arith.constant 1040 : index
    %c0_5 = arith.constant 0 : index
    %5 = vector.load %arg1[%c1040, %c0_5] : memref<1200x512xf32, #tpu.memory_space<vmem>>, vector<16x256xf32>
    %c1056 = arith.constant 1056 : index
    %c0_6 = arith.constant 0 : index
    %6 = vector.load %arg1[%c1056, %c0_6] : memref<1200x512xf32, #tpu.memory_space<vmem>>, vector<32x512xf32>
    %c1088 = arith.constant 1088 : index
    %c0_7 = arith.constant 0 : index
    %7 = vector.load %arg1[%c1088, %c0_7] : memref<1200x512xf32, #tpu.memory_space<vmem>>, vector<32x512xf32>
    %c1120 = arith.constant 1120 : index
    %c0_8 = arith.constant 0 : index
    %8 = vector.load %arg1[%c1120, %c0_8] : memref<1200x512xf32, #tpu.memory_space<vmem>>, vector<32x256xf32>
    %c1152 = arith.constant 1152 : index
    %c0_9 = arith.constant 0 : index
    %9 = vector.load %arg1[%c1152, %c0_9] : memref<1200x512xf32, #tpu.memory_space<vmem>>, vector<1x512xf32>
    %c1160 = arith.constant 1160 : index
    %c0_10 = arith.constant 0 : index
    %10 = vector.load %arg1[%c1160, %c0_10] : memref<1200x512xf32, #tpu.memory_space<vmem>>, vector<1x128xf32>
    %c1168 = arith.constant 1168 : index
    %c0_11 = arith.constant 0 : index
    %11 = vector.load %arg1[%c1168, %c0_11] : memref<1200x512xf32, #tpu.memory_space<vmem>>, vector<1x256xf32>
    %c1176 = arith.constant 1176 : index
    %c0_12 = arith.constant 0 : index
    %12 = vector.load %arg1[%c1176, %c0_12] : memref<1200x512xf32, #tpu.memory_space<vmem>>, vector<1x512xf32>
    %c1184 = arith.constant 1184 : index
    %c0_13 = arith.constant 0 : index
    %13 = vector.load %arg1[%c1184, %c0_13] : memref<1200x512xf32, #tpu.memory_space<vmem>>, vector<1x512xf32>
    %c1192 = arith.constant 1192 : index
    %c0_14 = arith.constant 0 : index
    %14 = vector.load %arg1[%c1192, %c0_14] : memref<1200x512xf32, #tpu.memory_space<vmem>>, vector<1x256xf32>
    %c0_15 = arith.constant 0 : index
    %c0_16 = arith.constant 0 : index
    %c0_17 = arith.constant 0 : index
    %15 = vector.load %arg2[%c0_15, %c0_16, %c0_17] : memref<1x16x32xf32, #tpu.memory_space<vmem>>, vector<1x16x32xf32>
    %16 = vector.shape_cast %15 : vector<1x16x32xf32> to vector<16x32xf32>
    %c0_18 = arith.constant 0 : index
    %c0_19 = arith.constant 0 : index
    %c0_20 = arith.constant 0 : index
    %17 = vector.load %arg4[%c0_18, %c0_19, %c0_20] : memref<1x16x8xf32, #tpu.memory_space<vmem>>, vector<1x16x8xf32>
    %18 = vector.shape_cast %17 : vector<1x16x8xf32> to vector<16x8xf32>
    %c0_21 = arith.constant 0 : index
    %c0_22 = arith.constant 0 : index
    %c0_23 = arith.constant 0 : index
    %19 = vector.load %arg3[%c0_21, %c0_22, %c0_23] : memref<1x1x256xf32, #tpu.memory_space<vmem>>, vector<1x1x256xf32>
    %20 = vector.shape_cast %19 : vector<1x1x256xf32> to vector<1x256xf32>
    %cst = arith.constant dense<0.000000e+00> : vector<16x16xf32>
    %21 = tpu.matmul %18, %18, %cst {dimension_numbers = #tpu.dot_dimension_numbers<[1], [1], [0], [0], [0, 0, 1, 0], [], []>} : vector<16x8xf32>, vector<16x8xf32>, vector<16x16xf32> -> vector<16x16xf32>
    %cst_24 = arith.constant dense<0.000000e+00> : vector<16x128xf32>
    %22 = tpu.matmul %21, %4, %cst_24 {dimension_numbers = #tpu.dot_dimension_numbers<[1], [0], [0], [1], [0, 0, 1, 1], [], []>} : vector<16x16xf32>, vector<16x128xf32>, vector<16x128xf32> -> vector<16x128xf32>
    %23 = vector.broadcast %10 : vector<1x128xf32> to vector<16x128xf32>
    %24 = arith.subf %22, %23 : vector<16x128xf32>
    %25 = arith.mulf %24, %24 : vector<16x128xf32>
    %cst_25 = arith.constant -5.000000e-01 : f32
    %26 = vector.broadcast %cst_25 : f32 to vector<16x128xf32>
    %27 = arith.mulf %26, %25 : vector<16x128xf32>
    %28 = math.exp %27 : vector<16x128xf32>
    %cst_26 = arith.constant dense<0.000000e+00> : vector<16x512xf32>
    %29 = tpu.matmul %28, %0, %cst_26 {dimension_numbers = #tpu.dot_dimension_numbers<[1], [0], [0], [1], [0, 0, 1, 1], [], []>} : vector<16x128xf32>, vector<128x512xf32>, vector<16x512xf32> -> vector<16x512xf32>
    %30 = vector.broadcast %9 : vector<1x512xf32> to vector<16x512xf32>
    %31 = arith.addf %29, %30 : vector<16x512xf32>
    %cst_27 = arith.constant dense<0.000000e+00> : vector<16x512xf32>
    %32 = tpu.matmul %16, %6, %cst_27 {dimension_numbers = #tpu.dot_dimension_numbers<[1], [0], [0], [1], [0, 0, 1, 1], [], []>} : vector<16x32xf32>, vector<32x512xf32>, vector<16x512xf32> -> vector<16x512xf32>
    %33 = vector.broadcast %12 : vector<1x512xf32> to vector<16x512xf32>
    %34 = arith.addf %32, %33 : vector<16x512xf32>
    %cst_28 = arith.constant dense<0.000000e+00> : vector<16x512xf32>
    %35 = tpu.matmul %16, %7, %cst_28 {dimension_numbers = #tpu.dot_dimension_numbers<[1], [0], [0], [1], [0, 0, 1, 1], [], []>} : vector<16x32xf32>, vector<32x512xf32>, vector<16x512xf32> -> vector<16x512xf32>
    %36 = vector.broadcast %13 : vector<1x512xf32> to vector<16x512xf32>
    %37 = arith.addf %35, %36 : vector<16x512xf32>
    %cst_29 = arith.constant dense<0.000000e+00> : vector<16x256xf32>
    %38 = tpu.matmul %16, %8, %cst_29 {dimension_numbers = #tpu.dot_dimension_numbers<[1], [0], [0], [1], [0, 0, 1, 1], [], []>} : vector<16x32xf32>, vector<32x256xf32>, vector<16x256xf32> -> vector<16x256xf32>
    %39 = vector.broadcast %14 : vector<1x256xf32> to vector<16x256xf32>
    %40 = arith.addf %38, %39 : vector<16x256xf32>
    %41 = arith.mulf %34, %37 : vector<16x512xf32>
    %42 = arith.mulf %41, %31 : vector<16x512xf32>
    %cst_30 = arith.constant dense<0.000000e+00> : vector<16x256xf32>
    %43 = tpu.matmul %42, %1, %cst_30 {dimension_numbers = #tpu.dot_dimension_numbers<[1], [0], [0], [1], [0, 0, 1, 1], [], []>} : vector<16x512xf32>, vector<512x256xf32>, vector<16x256xf32> -> vector<16x256xf32>
    %44 = arith.addf %43, %40 : vector<16x256xf32>
    %45 = math.tanh %44 : vector<16x256xf32>
    %46 = arith.mulf %5, %45 : vector<16x256xf32>
    %cst_31 = arith.constant dense<0.000000e+00> : vector<256xf32>
    %47 = vector.multi_reduction <add>, %46, %cst_31 [0] : vector<16x256xf32> to vector<256xf32>
    %48 = vector.shape_cast %47 : vector<256xf32> to vector<1x256xf32>
    %49 = arith.mulf %11, %20 : vector<1x256xf32>
    %50 = arith.addf %49, %48 : vector<1x256xf32>
    %c0_32 = arith.constant 0 : index
    %c0_33 = arith.constant 0 : index
    %c0_34 = arith.constant 0 : index
    %51 = vector.load %arg6[%c0_32, %c0_33, %c0_34] : memref<1x1x256xf32, #tpu.memory_space<vmem>>, vector<1x1x256xf32>
    %52 = vector.shape_cast %51 : vector<1x1x256xf32> to vector<1x256xf32>
    %53 = vector.shape_cast %50 : vector<1x256xf32> to vector<1x1x256xf32>
    tpu.vector_store %arg6[%c0_32, %c0_33, %c0_34], %53 {strides = array<i32>} : memref<1x1x256xf32, #tpu.memory_space<vmem>>, vector<1x1x256xf32>,
    %cst_35 = arith.constant dense<0.000000e+00> : vector<1x128xf32>
    %54 = tpu.matmul %50, %2, %cst_35 {dimension_numbers = #tpu.dot_dimension_numbers<[1], [0], [0], [1], [0, 0, 1, 1], [], []>} : vector<1x256xf32>, vector<256x128xf32>, vector<1x128xf32> -> vector<1x128xf32>
    %55 = arith.mulf %54, %54 : vector<1x128xf32>
    %cst_36 = arith.constant dense<0.000000e+00> : vector<1x128xf32>
    %56 = tpu.matmul %55, %3, %cst_36 {dimension_numbers = #tpu.dot_dimension_numbers<[1], [0], [0], [1], [0, 0, 1, 1], [], []>} : vector<1x128xf32>, vector<128x128xf32>, vector<1x128xf32> -> vector<1x128xf32>
    %cst_37 = arith.constant 9.99999996E-13 : f32
    %57 = vector.broadcast %cst_37 : f32 to vector<1x128xf32>
    %58 = arith.addf %56, %57 : vector<1x128xf32>
    %59 = math.rsqrt %58 : vector<1x128xf32>
    %60 = arith.mulf %54, %59 : vector<1x128xf32>
    %c0_38 = arith.constant 0 : index
    %c0_39 = arith.constant 0 : index
    %c0_40 = arith.constant 0 : index
    %61 = vector.load %arg5[%c0_38, %c0_39, %c0_40] : memref<1x1x128xf32, #tpu.memory_space<vmem>>, vector<1x1x128xf32>
    %62 = vector.shape_cast %61 : vector<1x1x128xf32> to vector<1x128xf32>
    %63 = vector.shape_cast %60 : vector<1x128xf32> to vector<1x1x128xf32>
    tpu.vector_store %arg5[%c0_38, %c0_39, %c0_40], %63 {strides = array<i32>} : memref<1x1x128xf32, #tpu.memory_space<vmem>>, vector<1x1x128xf32>,
    return
  }
  func.func @transform_0(%arg0: i32) -> (i32, i32) {
    %c0_i32 = arith.constant 0 : i32
    %c0_i32_0 = arith.constant 0 : i32
    %c0_i32_1 = arith.constant 0 : i32
    return %c0_i32, %c0_i32_0 : i32, i32
  }
  func.func @transform_1(%arg0: i32) -> (i32, i32, i32) {
    %c0_i32 = arith.constant 0 : i32
    %c0_i32_0 = arith.constant 0 : i32
    %c0_i32_1 = arith.constant 0 : i32
    return %arg0, %c0_i32, %c0_i32_0 : i32, i32, i32
  }
  func.func @transform_2(%arg0: i32) -> (i32, i32, i32) {
    %c0_i32 = arith.constant 0 : i32
    %c0_i32_0 = arith.constant 0 : i32
    %c0_i32_1 = arith.constant 0 : i32
    return %arg0, %c0_i32, %c0_i32_0 : i32, i32, i32
  }
  func.func @transform_3(%arg0: i32) -> (i32, i32, i32) {
    %c0_i32 = arith.constant 0 : i32
    %c0_i32_0 = arith.constant 0 : i32
    %c0_i32_1 = arith.constant 0 : i32
    return %arg0, %c0_i32, %c0_i32_0 : i32, i32, i32
  }
  func.func @transform_4(%arg0: i32) -> (i32, i32, i32) {
    %c0_i32 = arith.constant 0 : i32
    %c0_i32_0 = arith.constant 0 : i32
    %c0_i32_1 = arith.constant 0 : i32
    return %arg0, %c0_i32, %c0_i32_0 : i32, i32, i32
  }
  func.func @transform_5(%arg0: i32) -> (i32, i32, i32) {
    %c0_i32 = arith.constant 0 : i32
    %c0_i32_0 = arith.constant 0 : i32
    %c0_i32_1 = arith.constant 0 : i32
    return %arg0, %c0_i32, %c0_i32_0 : i32, i32, i32
  }
}

</mosaic_0001>

<llo_original>
// kernel: spat_conv_forward.1
$region0: #{spat_conv_forward.1}
  #allocation0 [shape = 'u32[]', space=smem, size = 0x4, offset = 0x4, fixed_abs, tag = 'smem constant byte address 0x4 - core index']
  #allocation1 [shape = 'u32[144,128]{1,0:T(1,128)}', space=vmem, size = 0x12000, scoped, tag = 'internal scratch']
  %s0 = inlined_call_operand.hbm [shape: f32[1200,512], index: 0, kind: input, shape index: {}]
  %s1 = inlined_call_operand.hbm [shape: f32[4,16,32], index: 1, kind: input, shape index: {}]
  %s2 = inlined_call_operand.hbm [shape: f32[4,1,256], index: 2, kind: input, shape index: {}]
  %s3 = inlined_call_operand.vmem [shape: f32[4,16,8], index: 3, kind: input, shape index: {}]
  %s4 = inlined_call_operand.hbm [shape: f32[4,1,128], index: 4, kind: output, shape index: {0}]
  %s5 = inlined_call_operand.hbm [shape: f32[4,1,256], index: 5, kind: output, shape index: {1}]
  %6 = xla_tuple %s4, %s5
  %s7 = sld [smem:[#allocation0]]
  $region69: #{spat_conv_forward.1} parent=0
    _
  %s9 = ssub.s32 1, %s7
  %s10 = scalar_select 0, %s9, %s7
  $region1: #{spat_conv_forward.1} parent=0
    #allocation2 [shape = 'u8[2457600]{0}', space=vmem, size = 0x258000, scoped, tag = 'input window, operand 0, single buffered']
    #allocation3 [shape = 's32[2]{0}', space=sflag, size = 0x8, scoped, tag = 'scoped memory for spat_conv_forward.1']
    #allocation4 [shape = 's32[2]{0}', space=sflag, size = 0x8, scoped, tag = 'scoped memory for spat_conv_forward.1']
    #allocation5 [shape = 'u8[16384]{0}', space=vmem, size = 0x4000, scoped, tag = 'input window, operand 1']
    #allocation6 [shape = 's32[2]{0}', space=sflag, size = 0x8, scoped, tag = 'scoped memory for spat_conv_forward.1']
    #allocation7 [shape = 'u8[2048]{0}', space=vmem, size = 0x800, scoped, tag = 'input window, operand 2']
    #allocation8 [shape = 'u8[1024]{0}', space=vmem, size = 0x400, scoped, tag = 'output window, operand 0']
    #allocation9 [shape = 'u8[2048]{0}', space=vmem, size = 0x800, scoped, tag = 'output window, operand 1']
    #allocation10 [shape = 's32[2]{0}', space=sflag, size = 0x8, scoped, tag = 'scoped memory for spat_conv_forward.1']
    %11 = vsyncpa [#allocation3], 0
    %12 = vsyncpa [#allocation6], 0
    %s13 = scalar_lea.sflag [#allocation6], 1
    %14 = vsyncpa %s13, 0
    %15 = vsyncpa [#allocation4], 0
    %s16 = scalar_lea.sflag [#allocation4], 1
    %17 = vsyncpa %s16, 0
    %18 = vsyncpa [#allocation10], 0
    %s19 = scalar_lea.sflag [#allocation10], 1
    %20 = vsyncpa %s19, 0
    loop: start=0, step=1, limit=6
    $region2: #{spat_conv_forward.1} parent=1 // loop_pre_header
      _
    $region3: #{spat_conv_forward.1} parent=1 // loop_header
      %s22 = sphi 0, %s26
      %p23 = scmp.ge.s32.totalorder %s22, 6
      %s30 = sphi 0, %s30
      %s32 = sphi 0, %s30
      %s33 = sphi 0, %s32
      %s47 = sphi 0, %s33
      %s53 = sphi 0, %s55
      %s56 = sphi 0, %s53
      %s57 = sphi 0, %s56
      %s73 = sphi 0, %s57
      %s79 = sphi 0, %s81
      %s82 = sphi 0, %s79
      %s83 = sphi 0, %s82
      %s99 = sphi 0, %s83
      %s105 = sphi 0, %s107
      %s108 = sphi 0, %s105
      %s109 = sphi 0, %s108
      %s125 = sphi 0, %s109
      %s131 = sphi 0, %s133
      %s134 = sphi 0, %s131
      %s135 = sphi 0, %s134
      %s151 = sphi 0, %s135
      %s157 = sphi 0, %s159
      %s160 = sphi 0, %s157
      %s161 = sphi 0, %s160
      %s177 = sphi 0, %s161
    $region4: #{spat_conv_forward.1} parent=1 // loop_header_branch
      %25 = sbr.rel (%p23) target = $region8
    $region5: #{spat_conv_forward.1} parent=1 // loop_body
      %s27 = ssub.s32 %s22, 1
      %s28 = ssub.s32 %s22, 2
      %s29 = sadd.s32 %s22, 1
      %s31 = sadd.s32 %s30, 1
      %p34 = scmp.eq.s32.totalorder %s22, 3
      %p35 = scmp.ne.s32.totalorder %s30, %s32
      %p36 = scmp.eq.s32.totalorder %s22, 0
      %p37 = por %p35, %p36
      %p38 = scmp.ne.s32.totalorder %s30, %s32
      %p39 = scmp.eq.s32.totalorder %s27, 3
      %p40 = por %p38, %p39
      %p41 = scmp.ne.s32.totalorder %s32, %s33
      %p42 = scmp.eq.s32.totalorder %s27, 0
      %p43 = por %p41, %p42
      %p44 = scmp.ne.s32.totalorder %s32, %s33
      %p45 = scmp.eq.s32.totalorder %s28, 3
      %p46 = por %p44, %p45
      %p48 = scmp.ne.s32.totalorder %s33, %s47
      %p49 = scmp.eq.s32.totalorder %s28, 0
      %p50 = por %p48, %p49
      %s51 = ssub.s32 %s22, %s29
      %p52 = scmp.eq.s32.totalorder %s51, 0
      %s54 = sadd.s32 %s53, 1
      %s55 = scalar_select %p52, %s53, %s54
      %p58 = pneg %p52
      %p59 = scmp.eq.s32.totalorder %s22, 3
      %p60 = por %p58, %p59
      %p61 = scmp.ne.s32.totalorder %s53, %s56
      %p62 = scmp.eq.s32.totalorder %s22, 0
      %p63 = por %p61, %p62
      %p64 = scmp.ne.s32.totalorder %s53, %s56
      %p65 = scmp.eq.s32.totalorder %s27, 3
      %p66 = por %p64, %p65
      %p67 = scmp.ne.s32.totalorder %s56, %s57
      %p68 = scmp.eq.s32.totalorder %s27, 0
      %p69 = por %p67, %p68
      %p70 = scmp.ne.s32.totalorder %s56, %s57
      %p71 = scmp.eq.s32.totalorder %s28, 3
      %p72 = por %p70, %p71
      %p74 = scmp.ne.s32.totalorder %s57, %s73
      %p75 = scmp.eq.s32.totalorder %s28, 0
      %p76 = por %p74, %p75
      %s77 = ssub.s32 %s22, %s29
      %p78 = scmp.eq.s32.totalorder %s77, 0
      %s80 = sadd.s32 %s79, 1
      %s81 = scalar_select %p78, %s79, %s80
      %p84 = pneg %p78
      %p85 = scmp.eq.s32.totalorder %s22, 3
      %p86 = por %p84, %p85
      %p87 = scmp.ne.s32.totalorder %s79, %s82
      %p88 = scmp.eq.s32.totalorder %s22, 0
      %p89 = por %p87, %p88
      %p90 = scmp.ne.s32.totalorder %s79, %s82
      %p91 = scmp.eq.s32.totalorder %s27, 3
      %p92 = por %p90, %p91
      %p93 = scmp.ne.s32.totalorder %s82, %s83
      %p94 = scmp.eq.s32.totalorder %s27, 0
      %p95 = por %p93, %p94
      %p96 = scmp.ne.s32.totalorder %s82, %s83
      %p97 = scmp.eq.s32.totalorder %s28, 3
      %p98 = por %p96, %p97
      %p100 = scmp.ne.s32.totalorder %s83, %s99
      %p101 = scmp.eq.s32.totalorder %s28, 0
      %p102 = por %p100, %p101
      %s103 = ssub.s32 %s22, %s29
      %p104 = scmp.eq.s32.totalorder %s103, 0
      %s106 = sadd.s32 %s105, 1
      %s107 = scalar_select %p104, %s105, %s106
      %p110 = pneg %p104
      %p111 = scmp.eq.s32.totalorder %s22, 3
      %p112 = por %p110, %p111
      %p113 = scmp.ne.s32.totalorder %s105, %s108
      %p114 = scmp.eq.s32.totalorder %s22, 0
      %p115 = por %p113, %p114
      %p116 = scmp.ne.s32.totalorder %s105, %s108
      %p117 = scmp.eq.s32.totalorder %s27, 3
      %p118 = por %p116, %p117
      %p119 = scmp.ne.s32.totalorder %s108, %s109
      %p120 = scmp.eq.s32.totalorder %s27, 0
      %p121 = por %p119, %p120
      %p122 = scmp.ne.s32.totalorder %s108, %s109
      %p123 = scmp.eq.s32.totalorder %s28, 3
      %p124 = por %p122, %p123
      %p126 = scmp.ne.s32.totalorder %s109, %s125
      %p127 = scmp.eq.s32.totalorder %s28, 0
      %p128 = por %p126, %p127
      %s129 = ssub.s32 %s22, %s29
      %p130 = scmp.eq.s32.totalorder %s129, 0
      %s132 = sadd.s32 %s131, 1
      %s133 = scalar_select %p130, %s131, %s132
      %p136 = pneg %p130
      %p137 = scmp.eq.s32.totalorder %s22, 3
      %p138 = por %p136, %p137
      %p139 = scmp.ne.s32.totalorder %s131, %s134
      %p140 = scmp.eq.s32.totalorder %s22, 0
      %p141 = por %p139, %p140
      %p142 = scmp.ne.s32.totalorder %s131, %s134
      %p143 = scmp.eq.s32.totalorder %s27, 3
      %p144 = por %p142, %p143
      %p145 = scmp.ne.s32.totalorder %s134, %s135
      %p146 = scmp.eq.s32.totalorder %s27, 0
      %p147 = por %p145, %p146
      %p148 = scmp.ne.s32.totalorder %s134, %s135
      %p149 = scmp.eq.s32.totalorder %s28, 3
      %p150 = por %p148, %p149
      %p152 = scmp.ne.s32.totalorder %s135, %s151
      %p153 = scmp.eq.s32.totalorder %s28, 0
      %p154 = por %p152, %p153
      %s155 = ssub.s32 %s22, %s29
      %p156 = scmp.eq.s32.totalorder %s155, 0
      %s158 = sadd.s32 %s157, 1
      %s159 = scalar_select %p156, %s157, %s158
      %p162 = pneg %p156
      %p163 = scmp.eq.s32.totalorder %s22, 3
      %p164 = por %p162, %p163
      %p165 = scmp.ne.s32.totalorder %s157, %s160
      %p166 = scmp.eq.s32.totalorder %s22, 0
      %p167 = por %p165, %p166
      %p168 = scmp.ne.s32.totalorder %s157, %s160
      %p169 = scmp.eq.s32.totalorder %s27, 3
      %p170 = por %p168, %p169
      %p171 = scmp.ne.s32.totalorder %s160, %s161
      %p172 = scmp.eq.s32.totalorder %s27, 0
      %p173 = por %p171, %p172
      %p174 = scmp.ne.s32.totalorder %s160, %s161
      %p175 = scmp.eq.s32.totalorder %s28, 3
      %p176 = por %p174, %p175
      %p178 = scmp.ne.s32.totalorder %s161, %s177
      %p179 = scmp.eq.s32.totalorder %s28, 0
      %p180 = por %p178, %p179
      %p181 = scmp.le.s32.totalorder 1, %s22
      %p182 = scmp.lt.s32.totalorder %s22, 5
      %p183 = pnand %p181, %p182
      %p184 = pneg %p183
      // Predicated region
      $region9: #{spat_conv_forward.1} parent=5 // pred_check
        _
      $region10: #{spat_conv_forward.1} parent=5 // pred_check_branch
        %186 = sbr.rel (%p183) target = $region12
      $region11: #{spat_conv_forward.1} parent=5 // pred_region
        %s187 = ssub.s32 %s22, 1
        // Predicated region
        $region13: #{spat_conv_forward.1} parent=11 // pred_check
          %p188 = pneg %p43
        $region14: #{spat_conv_forward.1} parent=11 // pred_check_branch
          %190 = sbr.rel (%p188) target = $region16
        $region15: #{spat_conv_forward.1} parent=11 // pred_region
          %s192 = ssub.s32 76800, 76800
          %193 = vsyncadd [#allocation3], %s192
          %s194 = sshll.u32 [#allocation2], 4
          %s195 = int_to_ptr.vmem [resolvable:$true] %s194
          %200 = dma.hbm_to_vmem [thread:$0]  %s0, 76800, %s195, [#allocation3], 512, 512, 32
        $region16: #{spat_conv_forward.1} parent=11 // pred_fallthru
          _
      $region12: #{spat_conv_forward.1} parent=5 // pred_fallthru
        _
      %p201 = scmp.lt.s32.totalorder %s22, 4
      // Predicated region
      $region17: #{spat_conv_forward.1} parent=5 // pred_check
        %p202 = pneg %p201
      $region18: #{spat_conv_forward.1} parent=5 // pred_check_branch
        %204 = sbr.rel (%p202) target = $region20
      $region19: #{spat_conv_forward.1} parent=5 // pred_region
        // Predicated region
        $region21: #{spat_conv_forward.1} parent=19 // pred_check
          %p205 = pneg %p63
        $region22: #{spat_conv_forward.1} parent=19 // pred_check_branch
          %207 = sbr.rel (%p205) target = $region24
        $region23: #{spat_conv_forward.1} parent=19 // pred_region
          %s208 = sand.u32 %s22, 1
          %s209 = scalar_lea.sflag [#allocation6], %s208
          %s210 = sand.u32 %s53, 1
          %s211 = smul.addr %s210, 16
          %s212 = scalar_lea.vmem [#allocation5], %s211
          %s214 = ssub.s32 256, 256
          %215 = vsyncadd %s209, %s214
          %s216 = smul.addr %s22, 2
          %s217 = smul.addr %s216, 128
          %s218 = scalar_lea.hbm %s1, %s217
          %s219 = sshll.u32 %s212, 4
          %s220 = int_to_ptr.vmem [resolvable:$true] %s219
          %225 = dma.hbm_to_vmem [thread:$0]  %s218, 256, %s220, %s209, 128, 128, 8
        $region24: #{spat_conv_forward.1} parent=19 // pred_fallthru
          _
        // Predicated region
        $region25: #{spat_conv_forward.1} parent=19 // pred_check
          %p226 = pneg %p89
        $region26: #{spat_conv_forward.1} parent=19 // pred_check_branch
          %228 = sbr.rel (%p226) target = $region28
        $region27: #{spat_conv_forward.1} parent=19 // pred_region
          %s229 = sand.u32 %s22, 1
          %s230 = scalar_lea.sflag [#allocation6], %s229
          %s231 = sand.u32 %s79, 1
          %s232 = smul.addr %s231, 2
          %s233 = scalar_lea.vmem [#allocation7], %s232
          %s235 = ssub.s32 32, 32
          %236 = vsyncadd %s230, %s235
          %s237 = smul.addr %s22, 2
          %s238 = smul.addr %s237, 16
          %s239 = scalar_lea.hbm %s2, %s238
          %s241 = sshll.u32 %s233, 4
          %s242 = int_to_ptr.vmem [resolvable:$true] %s241
          %244 = dma.hbm_to_vmem [thread:$0]  %s239, 32, %s242, %s230
        $region28: #{spat_conv_forward.1} parent=19 // pred_fallthru
          _
        // Predicated region
        $region29: #{spat_conv_forward.1} parent=19 // pred_check
          %p245 = pneg %p115
        $region30: #{spat_conv_forward.1} parent=19 // pred_check_branch
          %247 = sbr.rel (%p245) target = $region32
        $region31: #{spat_conv_forward.1} parent=19 // pred_region
          %p248 = scmp.lt.s32.totalorder %s22, 3
          %s249 = scalar_select %p248, %s22, 3
          %s250 = smul.addr %s249, 2
          %s251 = smul.addr %s250, 8
          %s252 = scalar_lea.vmem %s3, %s251
        $region32: #{spat_conv_forward.1} parent=19 // pred_fallthru
          _
      $region20: #{spat_conv_forward.1} parent=5 // pred_fallthru
        _
      %p253 = scmp.le.s32.totalorder 1, %s22
      %p254 = scmp.lt.s32.totalorder %s22, 5
      %p255 = pnand %p253, %p254
      %p256 = pneg %p255
      // Predicated region
      $region33: #{spat_conv_forward.1} parent=5 // pred_check
        _
      $region34: #{spat_conv_forward.1} parent=5 // pred_check_branch
        %258 = sbr.rel (%p255) target = $region36
      $region35: #{spat_conv_forward.1} parent=5 // pred_region
        %s259 = ssub.s32 %s22, 1
        // Predicated region
        $region37: #{spat_conv_forward.1} parent=35 // pred_check
          %p260 = pneg %p43
        $region38: #{spat_conv_forward.1} parent=35 // pred_check_branch
          %262 = sbr.rel (%p260) target = $region40
        $region39: #{spat_conv_forward.1} parent=35 // pred_region
          %263 = dma.done [#allocation3], 76800
        $region40: #{spat_conv_forward.1} parent=35 // pred_fallthru
          _
        %s264 = sand.u32 %s27, 1
        %s265 = scalar_lea.sflag [#allocation6], %s264
        %s266 = sand.u32 %s56, 1
        %s267 = smul.addr %s266, 16
        %s268 = scalar_lea.vmem [#allocation5], %s267
        // Predicated region
        $region41: #{spat_conv_forward.1} parent=35 // pred_check
          %p269 = pneg %p69
        $region42: #{spat_conv_forward.1} parent=35 // pred_check_branch
          %271 = sbr.rel (%p269) target = $region44
        $region43: #{spat_conv_forward.1} parent=35 // pred_region
          %272 = dma.done %s265, 256
        $region44: #{spat_conv_forward.1} parent=35 // pred_fallthru
          _
        %s273 = sand.u32 %s27, 1
        %s274 = scalar_lea.sflag [#allocation6], %s273
        %s275 = sand.u32 %s82, 1
        %s276 = smul.addr %s275, 2
        %s277 = scalar_lea.vmem [#allocation7], %s276
        // Predicated region
        $region45: #{spat_conv_forward.1} parent=35 // pred_check
          %p278 = pneg %p95
        $region46: #{spat_conv_forward.1} parent=35 // pred_check_branch
          %280 = sbr.rel (%p278) target = $region48
        $region47: #{spat_conv_forward.1} parent=35 // pred_region
          %281 = dma.done %s274, 32
        $region48: #{spat_conv_forward.1} parent=35 // pred_fallthru
          _
        %p282 = pneg %p43
        %p283 = pneg %p40
        %s284 = sand.u32 %s27, 1
        %s285 = scalar_lea.sflag [#allocation6], %s284
        %s286 = sand.u32 %s56, 1
        %s287 = smul.addr %s286, 16
        %s288 = scalar_lea.vmem [#allocation5], %s287
        %p289 = pneg %p69
        %p290 = pneg %p66
        %s291 = sand.u32 %s27, 1
        %s292 = scalar_lea.sflag [#allocation6], %s291
        %s293 = sand.u32 %s82, 1
        %s294 = smul.addr %s293, 2
        %s295 = scalar_lea.vmem [#allocation7], %s294
        %p296 = pneg %p95
        %p297 = pneg %p92
        %p298 = scmp.lt.s32.totalorder %s27, 3
        %s299 = scalar_select %p298, %s27, 3
        %s300 = smul.addr %s299, 2
        %s301 = smul.addr %s300, 8
        %s302 = scalar_lea.vmem %s3, %s301
        %p303 = pneg %p121
        %p304 = pneg %p118
        %p305 = pneg %p147
        %p306 = pneg %p144
        %s307 = sand.u32 %s134, 1
        %s308 = scalar_lea.sflag [#allocation4], %s307
        %s309 = sand.u32 %s134, 1
        %s310 = scalar_lea.vmem [#allocation8], %s309
        %p311 = pneg %p173
        %p312 = pneg %p170
        %s313 = sand.u32 %s160, 1
        %s314 = scalar_lea.sflag [#allocation10], %s313
        %s315 = sand.u32 %s160, 1
        %s316 = smul.addr %s315, 2
        %s317 = scalar_lea.vmem [#allocation9], %s316
        %p318 = scmp.lt.s32.totalorder %s27, 3
        %s319 = scalar_select %p318, %s27, 3
        %s320 = smul.addr %s319, 2
        %s321 = smul.addr %s320, 8
        %s322 = scalar_lea.vmem %s3, %s321
        %v323 = vld [vmem:[#allocation2] sm:$0xff]
        %v324 = vld [vmem:[#allocation2 + $0x8] sm:$0xff]
        %v325 = vld [vmem:[#allocation2 + $0x10] sm:$0xff]
        %v326 = vld [vmem:[#allocation2 + $0x18] sm:$0xff]
        %v327 = vld [vmem:[#allocation2 + $0x20] sm:$0xff]
        %v328 = vld [vmem:[#allocation2 + $0x28] sm:$0xff]
        %v329 = vld [vmem:[#allocation2 + $0x30] sm:$0xff]
        %v330 = vld [vmem:[#allocation2 + $0x38] sm:$0xff]
        %v331 = vld [vmem:[#allocation2 + $0x40] sm:$0xff]
        %v332 = vld [vmem:[#allocation2 + $0x48] sm:$0xff]
        %v333 = vld [vmem:[#allocation2 + $0x50] sm:$0xff]
        %v334 = vld [vmem:[#allocation2 + $0x58] sm:$0xff]
        %v335 = vld [vmem:[#allocation2 + $0x60] sm:$0xff]
        %v336 = vld [vmem:[#allocation2 + $0x68] sm:$0xff]
        %v337 = vld [vmem:[#allocation2 + $0x70] sm:$0xff]
        %v338 = vld [vmem:[#allocation2 + $0x78] sm:$0xff]
        %v339 = vld [vmem:[#allocation2 + $0x80] sm:$0xff]
        %v340 = vld [vmem:[#allocation2 + $0x88] sm:$0xff]
        %v341 = vld [vmem:[#allocation2 + $0x90] sm:$0xff]
        %v342 = vld [vmem:[#allocation2 + $0x98] sm:$0xff]
        %v343 = vld [vmem:[#allocation2 + $0xa0] sm:$0xff]
        %v344 = vld [vmem:[#allocation2 + $0xa8] sm:$0xff]
        %v345 = vld [vmem:[#allocation2 + $0xb0] sm:$0xff]
        %v346 = vld [vmem:[#allocation2 + $0xb8] sm:$0xff]
        %v347 = vld [vmem:[#allocation2 + $0xc0] sm:$0xff]
        %v348 = vld [vmem:[#allocation2 + $0xc8] sm:$0xff]
        %v349 = vld [vmem:[#allocation2 + $0xd0] sm:$0xff]
        %v350 = vld [vmem:[#allocation2 + $0xd8] sm:$0xff]
        %v351 = vld [vmem:[#allocation2 + $0xe0] sm:$0xff]
        %v352 = vld [vmem:[#allocation2 + $0xe8] sm:$0xff]
        %v353 = vld [vmem:[#allocation2 + $0xf0] sm:$0xff]
        %v354 = vld [vmem:[#allocation2 + $0xf8] sm:$0xff]
        %v355 = vld [vmem:[#allocation2 + $0x100] sm:$0xff]
        %v356 = vld [vmem:[#allocation2 + $0x108] sm:$0xff]
        %v357 = vld [vmem:[#allocation2 + $0x110] sm:$0xff]
        %v358 = vld [vmem:[#allocation2 + $0x118] sm:$0xff]
        %v359 = vld [vmem:[#allocation2 + $0x120] sm:$0xff]
        %v360 = vld [vmem:[#allocation2 + $0x128] sm:$0xff]
        %v361 = vld [vmem:[#allocation2 + $0x130] sm:$0xff]
        %v362 = vld [vmem:[#allocation2 + $0x138] sm:$0xff]
        %v363 = vld [vmem:[#allocation2 + $0x140] sm:$0xff]
        %v364 = vld [vmem:[#allocation2 + $0x148] sm:$0xff]
        %v365 = vld [vmem:[#allocation2 + $0x150] sm:$0xff]
        %v366 = vld [vmem:[#allocation2 + $0x158] sm:$0xff]
        %v367 = vld [vmem:[#allocation2 + $0x160] sm:$0xff]
        %v368 = vld [vmem:[#allocation2 + $0x168] sm:$0xff]
        %v369 = vld [vmem:[#allocation2 + $0x170] sm:$0xff]
        %v370 = vld [vmem:[#allocation2 + $0x178] sm:$0xff]
        %v371 = vld [vmem:[#allocation2 + $0x180] sm:$0xff]
        %v372 = vld [vmem:[#allocation2 + $0x188] sm:$0xff]
        %v373 = vld [vmem:[#allocation2 + $0x190] sm:$0xff]
        %v374 = vld [vmem:[#allocation2 + $0x198] sm:$0xff]
        %v375 = vld [vmem:[#allocation2 + $0x1a0] sm:$0xff]
        %v376 = vld [vmem:[#allocation2 + $0x1a8] sm:$0xff]
        %v377 = vld [vmem:[#allocation2 + $0x1b0] sm:$0xff]
        %v378 = vld [vmem:[#allocation2 + $0x1b8] sm:$0xff]
        %v379 = vld [vmem:[#allocation2 + $0x1c0] sm:$0xff]
        %v380 = vld [vmem:[#allocation2 + $0x1c8] sm:$0xff]
        %v381 = vld [vmem:[#allocation2 + $0x1d0] sm:$0xff]
        %v382 = vld [vmem:[#allocation2 + $0x1d8] sm:$0xff]
        %v383 = vld [vmem:[#allocation2 + $0x1e0] sm:$0xff]
        %v384 = vld [vmem:[#allocation2 + $0x1e8] sm:$0xff]
        %v385 = vld [vmem:[#allocation2 + $0x1f0] sm:$0xff]
        %v386 = vld [vmem:[#allocation2 + $0x1f8] sm:$0xff]
        %v387 = vld [vmem:[#allocation2 + $0x200] sm:$0xff]
        %v388 = vld [vmem:[#allocation2 + $0x208] sm:$0xff]
        %v389 = vld [vmem:[#allocation2 + $0x220] sm:$0xff]
        %v390 = vld [vmem:[#allocation2 + $0x228] sm:$0xff]
        %v391 = vld [vmem:[#allocation2 + $0x240] sm:$0xff]
        %v392 = vld [vmem:[#allocation2 + $0x248] sm:$0xff]
        %v393 = vld [vmem:[#allocation2 + $0x260] sm:$0xff]
        %v394 = vld [vmem:[#allocation2 + $0x268] sm:$0xff]
        %v395 = vld [vmem:[#allocation2 + $0x280] sm:$0xff]
        %v396 = vld [vmem:[#allocation2 + $0x288] sm:$0xff]
        %v397 = vld [vmem:[#allocation2 + $0x2a0] sm:$0xff]
        %v398 = vld [vmem:[#allocation2 + $0x2a8] sm:$0xff]
        %v399 = vld [vmem:[#allocation2 + $0x2c0] sm:$0xff]
        %v400 = vld [vmem:[#allocation2 + $0x2c8] sm:$0xff]
        %v401 = vld [vmem:[#allocation2 + $0x2e0] sm:$0xff]
        %v402 = vld [vmem:[#allocation2 + $0x2e8] sm:$0xff]
        %v403 = vld [vmem:[#allocation2 + $0x300] sm:$0xff]
        %v404 = vld [vmem:[#allocation2 + $0x308] sm:$0xff]
        %v405 = vld [vmem:[#allocation2 + $0x320] sm:$0xff]
        %v406 = vld [vmem:[#allocation2 + $0x328] sm:$0xff]
        %v407 = vld [vmem:[#allocation2 + $0x340] sm:$0xff]
        %v408 = vld [vmem:[#allocation2 + $0x348] sm:$0xff]
        %v409 = vld [vmem:[#allocation2 + $0x360] sm:$0xff]
        %v410 = vld [vmem:[#allocation2 + $0x368] sm:$0xff]
        %v411 = vld [vmem:[#allocation2 + $0x380] sm:$0xff]
        %v412 = vld [vmem:[#allocation2 + $0x388] sm:$0xff]
        %v413 = vld [vmem:[#allocation2 + $0x3a0] sm:$0xff]
        %v414 = vld [vmem:[#allocation2 + $0x3a8] sm:$0xff]
        %v415 = vld [vmem:[#allocation2 + $0x3c0] sm:$0xff]
        %v416 = vld [vmem:[#allocation2 + $0x3c8] sm:$0xff]
        %v417 = vld [vmem:[#allocation2 + $0x3e0] sm:$0xff]
        %v418 = vld [vmem:[#allocation2 + $0x3e8] sm:$0xff]
        %v419 = vld [vmem:[#allocation2 + $0x400] sm:$0xff]
        %v420 = vld [vmem:[#allocation2 + $0x408] sm:$0xff]
        %v421 = vld [vmem:[#allocation2 + $0x420] sm:$0xff]
        %v422 = vld [vmem:[#allocation2 + $0x428] sm:$0xff]
        %v423 = vld [vmem:[#allocation2 + $0x440] sm:$0xff]
        %v424 = vld [vmem:[#allocation2 + $0x448] sm:$0xff]
        %v425 = vld [vmem:[#allocation2 + $0x460] sm:$0xff]
        %v426 = vld [vmem:[#allocation2 + $0x468] sm:$0xff]
        %v427 = vld [vmem:[#allocation2 + $0x480] sm:$0xff]
        %v428 = vld [vmem:[#allocation2 + $0x488] sm:$0xff]
        %v429 = vld [vmem:[#allocation2 + $0x4a0] sm:$0xff]
        %v430 = vld [vmem:[#allocation2 + $0x4a8] sm:$0xff]
        %v431 = vld [vmem:[#allocation2 + $0x4c0] sm:$0xff]
        %v432 = vld [vmem:[#allocation2 + $0x4c8] sm:$0xff]
        %v433 = vld [vmem:[#allocation2 + $0x4e0] sm:$0xff]
        %v434 = vld [vmem:[#allocation2 + $0x4e8] sm:$0xff]
        %v435 = vld [vmem:[#allocation2 + $0x500] sm:$0xff]
        %v436 = vld [vmem:[#allocation2 + $0x508] sm:$0xff]
        %v437 = vld [vmem:[#allocation2 + $0x520] sm:$0xff]
        %v438 = vld [vmem:[#allocation2 + $0x528] sm:$0xff]
        %v439 = vld [vmem:[#allocation2 + $0x540] sm:$0xff]
        %v440 = vld [vmem:[#allocation2 + $0x548] sm:$0xff]
        %v441 = vld [vmem:[#allocation2 + $0x560] sm:$0xff]
        %v442 = vld [vmem:[#allocation2 + $0x568] sm:$0xff]
        %v443 = vld [vmem:[#allocation2 + $0x580] sm:$0xff]
        %v444 = vld [vmem:[#allocation2 + $0x588] sm:$0xff]
        %v445 = vld [vmem:[#allocation2 + $0x5a0] sm:$0xff]
        %v446 = vld [vmem:[#allocation2 + $0x5a8] sm:$0xff]
        %v447 = vld [vmem:[#allocation2 + $0x5c0] sm:$0xff]
        %v448 = vld [vmem:[#allocation2 + $0x5c8] sm:$0xff]
        %v449 = vld [vmem:[#allocation2 + $0x5e0] sm:$0xff]
        %v450 = vld [vmem:[#allocation2 + $0x5e8] sm:$0xff]
        %v451 = vld [vmem:[#allocation2 + $0x600] sm:$0xff]
        %v452 = vld [vmem:[#allocation2 + $0x608] sm:$0xff]
        %v453 = vld [vmem:[#allocation2 + $0x620] sm:$0xff]
        %v454 = vld [vmem:[#allocation2 + $0x628] sm:$0xff]
        %v455 = vld [vmem:[#allocation2 + $0x640] sm:$0xff]
        %v456 = vld [vmem:[#allocation2 + $0x648] sm:$0xff]
        %v457 = vld [vmem:[#allocation2 + $0x660] sm:$0xff]
        %v458 = vld [vmem:[#allocation2 + $0x668] sm:$0xff]
        %v459 = vld [vmem:[#allocation2 + $0x680] sm:$0xff]
        %v460 = vld [vmem:[#allocation2 + $0x688] sm:$0xff]
        %v461 = vld [vmem:[#allocation2 + $0x6a0] sm:$0xff]
        %v462 = vld [vmem:[#allocation2 + $0x6a8] sm:$0xff]
        %v463 = vld [vmem:[#allocation2 + $0x6c0] sm:$0xff]
        %v464 = vld [vmem:[#allocation2 + $0x6c8] sm:$0xff]
        %v465 = vld [vmem:[#allocation2 + $0x6e0] sm:$0xff]
        %v466 = vld [vmem:[#allocation2 + $0x6e8] sm:$0xff]
        %v467 = vld [vmem:[#allocation2 + $0x700] sm:$0xff]
        %v468 = vld [vmem:[#allocation2 + $0x708] sm:$0xff]
        %v469 = vld [vmem:[#allocation2 + $0x720] sm:$0xff]
        %v470 = vld [vmem:[#allocation2 + $0x728] sm:$0xff]
        %v471 = vld [vmem:[#allocation2 + $0x740] sm:$0xff]
        %v472 = vld [vmem:[#allocation2 + $0x748] sm:$0xff]
        %v473 = vld [vmem:[#allocation2 + $0x760] sm:$0xff]
        %v474 = vld [vmem:[#allocation2 + $0x768] sm:$0xff]
        %v475 = vld [vmem:[#allocation2 + $0x780] sm:$0xff]
        %v476 = vld [vmem:[#allocation2 + $0x788] sm:$0xff]
        %v477 = vld [vmem:[#allocation2 + $0x7a0] sm:$0xff]
        %v478 = vld [vmem:[#allocation2 + $0x7a8] sm:$0xff]
        %v479 = vld [vmem:[#allocation2 + $0x7c0] sm:$0xff]
        %v480 = vld [vmem:[#allocation2 + $0x7c8] sm:$0xff]
        %v481 = vld [vmem:[#allocation2 + $0x7e0] sm:$0xff]
        %v482 = vld [vmem:[#allocation2 + $0x7e8] sm:$0xff]
        %v483 = vld [vmem:[#allocation2 + $0x800] sm:$0xff]
        %v484 = vld [vmem:[#allocation2 + $0x808] sm:$0xff]
        %v485 = vld [vmem:[#allocation2 + $0x820] sm:$0xff]
        %v486 = vld [vmem:[#allocation2 + $0x828] sm:$0xff]
        %v487 = vld [vmem:[#allocation2 + $0x840] sm:$0xff]
        %v488 = vld [vmem:[#allocation2 + $0x848] sm:$0xff]
        %v489 = vld [vmem:[#allocation2 + $0x860] sm:$0xff]
        %v490 = vld [vmem:[#allocation2 + $0x868] sm:$0xff]
        %v491 = vld [vmem:[#allocation2 + $0x880] sm:$0xff]
        %v492 = vld [vmem:[#allocation2 + $0x888] sm:$0xff]
        %v493 = vld [vmem:[#allocation2 + $0x8a0] sm:$0xff]
        %v494 = vld [vmem:[#allocation2 + $0x8a8] sm:$0xff]
        %v495 = vld [vmem:[#allocation2 + $0x8c0] sm:$0xff]
        %v496 = vld [vmem:[#allocation2 + $0x8c8] sm:$0xff]
        %v497 = vld [vmem:[#allocation2 + $0x8e0] sm:$0xff]
        %v498 = vld [vmem:[#allocation2 + $0x8e8] sm:$0xff]
        %v499 = vld [vmem:[#allocation2 + $0x900] sm:$0xff]
        %v500 = vld [vmem:[#allocation2 + $0x908] sm:$0xff]
        %v501 = vld [vmem:[#allocation2 + $0x920] sm:$0xff]
        %v502 = vld [vmem:[#allocation2 + $0x928] sm:$0xff]
        %v503 = vld [vmem:[#allocation2 + $0x940] sm:$0xff]
        %v504 = vld [vmem:[#allocation2 + $0x948] sm:$0xff]
        %v505 = vld [vmem:[#allocation2 + $0x960] sm:$0xff]
        %v506 = vld [vmem:[#allocation2 + $0x968] sm:$0xff]
        %v507 = vld [vmem:[#allocation2 + $0x980] sm:$0xff]
        %v508 = vld [vmem:[#allocation2 + $0x988] sm:$0xff]
        %v509 = vld [vmem:[#allocation2 + $0x9a0] sm:$0xff]
        %v510 = vld [vmem:[#allocation2 + $0x9a8] sm:$0xff]
        %v511 = vld [vmem:[#allocation2 + $0x9c0] sm:$0xff]
        %v512 = vld [vmem:[#allocation2 + $0x9c8] sm:$0xff]
        %v513 = vld [vmem:[#allocation2 + $0x9e0] sm:$0xff]
        %v514 = vld [vmem:[#allocation2 + $0x9e8] sm:$0xff]
        %v515 = vld [vmem:[#allocation2 + $0xa00] sm:$0xff]
        %v516 = vld [vmem:[#allocation2 + $0xa20] sm:$0xff]
        %v517 = vld [vmem:[#allocation2 + $0xa40] sm:$0xff]
        %v518 = vld [vmem:[#allocation2 + $0xa60] sm:$0xff]
        %v519 = vld [vmem:[#allocation2 + $0xa80] sm:$0xff]
        %v520 = vld [vmem:[#allocation2 + $0xaa0] sm:$0xff]
        %v521 = vld [vmem:[#allocation2 + $0xac0] sm:$0xff]
        %v522 = vld [vmem:[#allocation2 + $0xae0] sm:$0xff]
        %v523 = vld [vmem:[#allocation2 + $0xb00] sm:$0xff]
        %v524 = vld [vmem:[#allocation2 + $0xb20] sm:$0xff]
        %v525 = vld [vmem:[#allocation2 + $0xb40] sm:$0xff]
        %v526 = vld [vmem:[#allocation2 + $0xb60] sm:$0xff]
        %v527 = vld [vmem:[#allocation2 + $0xb80] sm:$0xff]
        %v528 = vld [vmem:[#allocation2 + $0xba0] sm:$0xff]
        %v529 = vld [vmem:[#allocation2 + $0xbc0] sm:$0xff]
        %v530 = vld [vmem:[#allocation2 + $0xbe0] sm:$0xff]
        %v531 = vld [vmem:[#allocation2 + $0xc00] sm:$0xff]
        %v532 = vld [vmem:[#allocation2 + $0xc20] sm:$0xff]
        %v533 = vld [vmem:[#allocation2 + $0xc40] sm:$0xff]
        %v534 = vld [vmem:[#allocation2 + $0xc60] sm:$0xff]
        %v535 = vld [vmem:[#allocation2 + $0xc80] sm:$0xff]
        %v536 = vld [vmem:[#allocation2 + $0xca0] sm:$0xff]
        %v537 = vld [vmem:[#allocation2 + $0xcc0] sm:$0xff]
        %v538 = vld [vmem:[#allocation2 + $0xce0] sm:$0xff]
        %v539 = vld [vmem:[#allocation2 + $0xd00] sm:$0xff]
        %v540 = vld [vmem:[#allocation2 + $0xd20] sm:$0xff]
        %v541 = vld [vmem:[#allocation2 + $0xd40] sm:$0xff]
        %v542 = vld [vmem:[#allocation2 + $0xd60] sm:$0xff]
        %v543 = vld [vmem:[#allocation2 + $0xd80] sm:$0xff]
        %v544 = vld [vmem:[#allocation2 + $0xda0] sm:$0xff]
        %v545 = vld [vmem:[#allocation2 + $0xdc0] sm:$0xff]
        %v546 = vld [vmem:[#allocation2 + $0xde0] sm:$0xff]
        %v547 = vld [vmem:[#allocation2 + $0xe00] sm:$0xff]
        %v548 = vld [vmem:[#allocation2 + $0xe20] sm:$0xff]
        %v549 = vld [vmem:[#allocation2 + $0xe40] sm:$0xff]
        %v550 = vld [vmem:[#allocation2 + $0xe60] sm:$0xff]
        %v551 = vld [vmem:[#allocation2 + $0xe80] sm:$0xff]
        %v552 = vld [vmem:[#allocation2 + $0xea0] sm:$0xff]
        %v553 = vld [vmem:[#allocation2 + $0xec0] sm:$0xff]
        %v554 = vld [vmem:[#allocation2 + $0xee0] sm:$0xff]
        %v555 = vld [vmem:[#allocation2 + $0xf00] sm:$0xff]
        %v556 = vld [vmem:[#allocation2 + $0xf20] sm:$0xff]
        %v557 = vld [vmem:[#allocation2 + $0xf40] sm:$0xff]
        %v558 = vld [vmem:[#allocation2 + $0xf60] sm:$0xff]
        %v559 = vld [vmem:[#allocation2 + $0xf80] sm:$0xff]
        %v560 = vld [vmem:[#allocation2 + $0xfa0] sm:$0xff]
        %v561 = vld [vmem:[#allocation2 + $0xfc0] sm:$0xff]
        %v562 = vld [vmem:[#allocation2 + $0xfe0] sm:$0xff]
        %v563 = vld [vmem:[#allocation2 + $0x1000] sm:$0xff]
        %v564 = vld [vmem:[#allocation2 + $0x1020] sm:$0xff]
        %v565 = vld [vmem:[#allocation2 + $0x1040] sm:$0xff]
        %v566 = vld [vmem:[#allocation2 + $0x1048] sm:$0xff]
        %v567 = vld [vmem:[#allocation2 + $0x1060] sm:$0xff]
        %v568 = vld [vmem:[#allocation2 + $0x1068] sm:$0xff]
        %v569 = vld [vmem:[#allocation2 + $0x1080] sm:$0xff]
        %v570 = vld [vmem:[#allocation2 + $0x1088] sm:$0xff]
        %v571 = vld [vmem:[#allocation2 + $0x1090] sm:$0xff]
        %v572 = vld [vmem:[#allocation2 + $0x1098] sm:$0xff]
        %v573 = vld [vmem:[#allocation2 + $0x10a0] sm:$0xff]
        %v574 = vld [vmem:[#allocation2 + $0x10a8] sm:$0xff]
        %v575 = vld [vmem:[#allocation2 + $0x10b0] sm:$0xff]
        %v576 = vld [vmem:[#allocation2 + $0x10b8] sm:$0xff]
        %v577 = vld [vmem:[#allocation2 + $0x10c0] sm:$0xff]
        %v578 = vld [vmem:[#allocation2 + $0x10c8] sm:$0xff]
        %v579 = vld [vmem:[#allocation2 + $0x10d0] sm:$0xff]
        %v580 = vld [vmem:[#allocation2 + $0x10d8] sm:$0xff]
        %v581 = vld [vmem:[#allocation2 + $0x10e0] sm:$0xff]
        %v582 = vld [vmem:[#allocation2 + $0x10e8] sm:$0xff]
        %v583 = vld [vmem:[#allocation2 + $0x10f0] sm:$0xff]
        %v584 = vld [vmem:[#allocation2 + $0x10f8] sm:$0xff]
        %v585 = vld [vmem:[#allocation2 + $0x1100] sm:$0xff]
        %v586 = vld [vmem:[#allocation2 + $0x1108] sm:$0xff]
        %v587 = vld [vmem:[#allocation2 + $0x1110] sm:$0xff]
        %v588 = vld [vmem:[#allocation2 + $0x1118] sm:$0xff]
        %v589 = vld [vmem:[#allocation2 + $0x1120] sm:$0xff]
        %v590 = vld [vmem:[#allocation2 + $0x1128] sm:$0xff]
        %v591 = vld [vmem:[#allocation2 + $0x1130] sm:$0xff]
        %v592 = vld [vmem:[#allocation2 + $0x1138] sm:$0xff]
        %v593 = vld [vmem:[#allocation2 + $0x1140] sm:$0xff]
        %v594 = vld [vmem:[#allocation2 + $0x1148] sm:$0xff]
        %v595 = vld [vmem:[#allocation2 + $0x1150] sm:$0xff]
        %v596 = vld [vmem:[#allocation2 + $0x1158] sm:$0xff]
        %v597 = vld [vmem:[#allocation2 + $0x1160] sm:$0xff]
        %v598 = vld [vmem:[#allocation2 + $0x1168] sm:$0xff]
        %v599 = vld [vmem:[#allocation2 + $0x1170] sm:$0xff]
        %v600 = vld [vmem:[#allocation2 + $0x1178] sm:$0xff]
        %v601 = vld [vmem:[#allocation2 + $0x1180] sm:$0xff]
        %v602 = vld [vmem:[#allocation2 + $0x1188] sm:$0xff]
        %v603 = vld [vmem:[#allocation2 + $0x11a0] sm:$0xff]
        %v604 = vld [vmem:[#allocation2 + $0x11a8] sm:$0xff]
        %v605 = vld [vmem:[#allocation2 + $0x11c0] sm:$0xff]
        %v606 = vld [vmem:[#allocation2 + $0x11c8] sm:$0xff]
        %v607 = vld [vmem:[#allocation2 + $0x11e0] sm:$0xff]
        %v608 = vld [vmem:[#allocation2 + $0x11e8] sm:$0xff]
        %s609 = scalar_lea.vmem [#allocation2], 4608
        %v610 = vld [vmem:[%s609] ss:$8 sm:$0xf]
        %v611 = vld [vmem:[#allocation2 + $0x1220] ss:$0 sm:$0xff]
        %s612 = scalar_lea.vmem [#allocation2], 4672
        %v613 = vld [vmem:[%s612] ss:$8 sm:$0x3]
        %s614 = scalar_lea.vmem [#allocation2], 4704
        %v615 = vld [vmem:[%s614] ss:$8 sm:$0xf]
        %s616 = scalar_lea.vmem [#allocation2], 4736
        %v617 = vld [vmem:[%s616] ss:$8 sm:$0xf]
        %s618 = scalar_lea.vmem [#allocation2], 4768
        %v619 = vld [vmem:[%s618] ss:$8 sm:$0x3]
        %v620 = vld [vmem:[%s268] sm:$0xff]
        %v621 = vld [vmem:[%s268 + $0x8] sm:$0xff]
        %v622 = vld [vmem:[%s322] sm:$0xff]
        %v623 = vld [vmem:[%s322 + $0x8] sm:$0xff]
        %v624 = vld [vmem:[%s277] sm:$0x3]
        %vm625 = vcmask 64512
        %v627 = vsel %vm625, %v622, 0
        %v630 = vsel %vm625, %v623, 0
        %632 = vmatprep.subr.mxu0 0.0
        %633 = vmatpush1.xpose.msra.mxu0 %v627
        %634 = vmatprep.subr.mxu0 0.0
        %635 = vmatpush1.xpose.msra.mxu0 %v630
        %636 = vmatprep.subr.mxu0 0.0
        %637 = vmatpush1.xpose.msra.mxu0 0.0
        %638 = vmatprep.subr.mxu0 0.0
        %639 = vmatpush1.xpose.msra.mxu0 0.0
        %640 = vmatprep.subr.mxu0 0.0
        %641 = vmatpush1.xpose.msra.mxu0 0.0
        %642 = vmatprep.subr.mxu0 0.0
        %643 = vmatpush1.xpose.msra.mxu0 0.0
        %644 = vmatprep.subr.mxu0 0.0
        %645 = vmatpush1.xpose.msra.mxu0 0.0
        %646 = vmatprep.subr.mxu0 0.0
        %647 = vmatpush1.xpose.msra.mxu0 0.0
        %648 = vmatprep.subr.mxu0 0.0
        %649 = vmatpush1.xpose.msra.mxu0 0.0
        %650 = vmatprep.subr.mxu0 0.0
        %651 = vmatpush1.xpose.msra.mxu0 0.0
        %652 = vmatprep.subr.mxu0 0.0
        %653 = vmatpush1.xpose.msra.mxu0 0.0
        %654 = vmatprep.subr.mxu0 0.0
        %655 = vmatpush1.xpose.msra.mxu0 0.0
        %656 = vmatprep.subr.mxu0 0.0
        %657 = vmatpush1.xpose.msra.mxu0 0.0
        %658 = vmatprep.subr.mxu0 0.0
        %659 = vmatpush1.xpose.msra.mxu0 0.0
        %660 = vmatprep.subr.mxu0 0.0
        %661 = vmatpush1.xpose.msra.mxu0 0.0
        %662 = vmatprep.subr.mxu0 0.0
        %663 = vmatpush1.xpose.msra.mxu0 0.0
        %664 = vmatprep.subr.mxu0 0.0
        %665 = vmatpush1.xpose.msra.mxu0 0.0
        %666 = vmatprep.subr.mxu0 0.0
        %667 = vmatpush1.xpose.msra.mxu0 0.0
        %668 = vmatprep.subr.mxu0 0.0
        %669 = vmatpush1.xpose.msra.mxu0 0.0
        %670 = vmatprep.subr.mxu0 0.0
        %671 = vmatpush1.xpose.msra.mxu0 0.0
        %672 = vmatprep.subr.mxu0 0.0
        %673 = vmatpush1.xpose.msra.mxu0 0.0
        %674 = vmatprep.subr.mxu0 0.0
        %675 = vmatpush1.xpose.msra.mxu0 0.0
        %676 = vmatprep.subr.mxu0 0.0
        %677 = vmatpush1.xpose.msra.mxu0 0.0
        %678 = vmatprep.subr.mxu0 0.0
        %679 = vmatpush1.xpose.msra.mxu0 0.0
        %680 = vmatprep.subr.mxu0 0.0
        %681 = vmatpush1.xpose.msra.mxu0 0.0
        %682 = vmatprep.subr.mxu0 0.0
        %683 = vmatpush1.xpose.msra.mxu0 0.0
        %684 = vmatprep.subr.mxu0 0.0
        %685 = vmatpush1.xpose.msra.mxu0 0.0
        %686 = vmatprep.subr.mxu0 0.0
        %687 = vmatpush1.xpose.msra.mxu0 0.0
        %688 = vmatprep.subr.mxu0 0.0
        %689 = vmatpush1.xpose.msra.mxu0 0.0
        %690 = vmatprep.subr.mxu0 0.0
        %691 = vmatpush1.xpose.msra.mxu0 0.0
        %692 = vmatprep.subr.mxu0 0.0
        %693 = vmatpush1.xpose.msra.mxu0 0.0
        %694 = vmatprep.subr.mxu0 0.0
        %695 = vmatpush1.xpose.msra.mxu0 0.0
        %696 = vmatprep.mubr.f32.mxu0 0.0
        %697 = vmatmul.mubr.f32.gmra.mrb[0].mxu0 %v627
        %v698 = vpop.f32.mrb[0].mxu0
        %v699 = vadd.f32 0.0, %v698
        %v700 = vpop.f32.mrb[0].mxu0
        %701 = vmatprep.mubr.f32.mxu0 0.0
        %702 = vmatmul.mubr.f32.gmra.mrb[0].mxu0 %v630
        %v703 = vpop.f32.mrb[0].mxu0
        %v704 = vadd.f32 0.0, %v703
        %v705 = vpop.f32.mrb[0].mxu0
        %706 = vdwg.mxu0
        %vm707 = vcmask 130048
        %v709 = vsel %vm707, %v699, 0
        %v712 = vsel %vm707, %v704, 0
        %714 = vmatprep.subr.mxu0 0.0
        %715 = vmatpush1.msra.mxu0 %v563
        %716 = vmatprep.subr.mxu0 0.0
        %717 = vmatpush1.msra.mxu0 %v564
        %718 = vmatprep.subr.mxu0 0.0
        %719 = vmatpush1.msra.mxu0 0.0
        %720 = vmatprep.subr.mxu0 0.0
        %721 = vmatpush1.msra.mxu0 0.0
        %722 = vmatprep.subr.mxu0 0.0
        %723 = vmatpush1.msra.mxu0 0.0
        %724 = vmatprep.subr.mxu0 0.0
        %725 = vmatpush1.msra.mxu0 0.0
        %726 = vmatprep.subr.mxu0 0.0
        %727 = vmatpush1.msra.mxu0 0.0
        %728 = vmatprep.subr.mxu0 0.0
        %729 = vmatpush1.msra.mxu0 0.0
        %730 = vmatprep.subr.mxu0 0.0
        %731 = vmatpush1.msra.mxu0 0.0
        %732 = vmatprep.subr.mxu0 0.0
        %733 = vmatpush1.msra.mxu0 0.0
        %734 = vmatprep.subr.mxu0 0.0
        %735 = vmatpush1.msra.mxu0 0.0
        %736 = vmatprep.subr.mxu0 0.0
        %737 = vmatpush1.msra.mxu0 0.0
        %738 = vmatprep.subr.mxu0 0.0
        %739 = vmatpush1.msra.mxu0 0.0
        %740 = vmatprep.subr.mxu0 0.0
        %741 = vmatpush1.msra.mxu0 0.0
        %742 = vmatprep.subr.mxu0 0.0
        %743 = vmatpush1.msra.mxu0 0.0
        %744 = vmatprep.subr.mxu0 0.0
        %745 = vmatpush1.msra.mxu0 0.0
        %746 = vmatprep.subr.mxu0 0.0
        %747 = vmatpush1.msra.mxu0 0.0
        %748 = vmatprep.subr.mxu0 0.0
        %749 = vmatpush1.msra.mxu0 0.0
        %750 = vmatprep.subr.mxu0 0.0
        %751 = vmatpush1.msra.mxu0 0.0
        %752 = vmatprep.subr.mxu0 0.0
        %753 = vmatpush1.msra.mxu0 0.0
        %754 = vmatprep.subr.mxu0 0.0
        %755 = vmatpush1.msra.mxu0 0.0
        %756 = vmatprep.subr.mxu0 0.0
        %757 = vmatpush1.msra.mxu0 0.0
        %758 = vmatprep.subr.mxu0 0.0
        %759 = vmatpush1.msra.mxu0 0.0
        %760 = vmatprep.subr.mxu0 0.0
        %761 = vmatpush1.msra.mxu0 0.0
        %762 = vmatprep.subr.mxu0 0.0
        %763 = vmatpush1.msra.mxu0 0.0
        %764 = vmatprep.subr.mxu0 0.0
        %765 = vmatpush1.msra.mxu0 0.0
        %766 = vmatprep.subr.mxu0 0.0
        %767 = vmatpush1.msra.mxu0 0.0
        %768 = vmatprep.subr.mxu0 0.0
        %769 = vmatpush1.msra.mxu0 0.0
        %770 = vmatprep.subr.mxu0 0.0
        %771 = vmatpush1.msra.mxu0 0.0
        %772 = vmatprep.subr.mxu0 0.0
        %773 = vmatpush1.msra.mxu0 0.0
        %774 = vmatprep.subr.mxu0 0.0
        %775 = vmatpush1.msra.mxu0 0.0
        %776 = vmatprep.subr.mxu0 0.0
        %777 = vmatpush1.msra.mxu0 0.0
        %778 = vmatprep.mubr.f32.mxu0 0.0
        %779 = vmatmul.mubr.f32.gmra.mrb[0].mxu0 %v709
        %v780 = vpop.f32.mrb[0].mxu0
        %v781 = vadd.f32 0.0, %v780
        %v782 = vpop.f32.mrb[0].mxu0
        %783 = vmatprep.mubr.f32.mxu0 0.0
        %784 = vmatmul.mubr.f32.gmra.mrb[0].mxu0 %v712
        %v785 = vpop.f32.mrb[0].mxu0
        %v786 = vadd.f32 0.0, %v785
        %v787 = vpop.f32.mrb[0].mxu0
        %788 = vdwg.mxu0
        %v789 = vsub.f32 %v781, %v611
        %v790 = vsub.f32 %v786, %v611
        %v791 = vmul.f32 %v789, %v789
        %v792 = vmul.f32 %v790, %v790
        %v793 = vmul.f32 %v791, -0.5
        %v794 = vmul.f32 %v792, -0.5
        %v795 = vmul.f32 %v793, 1.442695
        %v796 = vpow.pop %v795
        %v797 = vmul.f32 %v794, 1.442695
        %v798 = vpow.pop %v797
        %v800 = vlaneseq
        %v801 = vshrl.u32 %v800, 7
        %v802 = vsub.s32 0, %v801
        %v803 = vrot.slane %v610, %v802
        %v804 = vlaneseq
        %v805 = vshrl.u32 %v804, 7
        %v806 = vsub.s32 1, %v805
        %v807 = vrot.slane %v610, %v806
        %v808 = vlaneseq
        %v809 = vshrl.u32 %v808, 7
        %v810 = vsub.s32 2, %v809
        %v811 = vrot.slane %v610, %v810
        %v812 = vlaneseq
        %v813 = vshrl.u32 %v812, 7
        %v814 = vsub.s32 3, %v813
        %v815 = vrot.slane %v610, %v814
        %820 = vmatprep.subr.mxu0 %v324
        %821 = vmatpush1.msra.mxu0 %v323
        %822 = vmatprep.subr.mxu0 %v328
        %823 = vmatpush1.msra.mxu0 %v327
        %824 = vmatprep.subr.mxu0 %v332
        %825 = vmatpush1.msra.mxu0 %v331
        %826 = vmatprep.subr.mxu0 %v336
        %827 = vmatpush1.msra.mxu0 %v335
        %828 = vmatprep.subr.mxu0 %v340
        %829 = vmatpush1.msra.mxu0 %v339
        %830 = vmatprep.subr.mxu0 %v344
        %831 = vmatpush1.msra.mxu0 %v343
        %832 = vmatprep.subr.mxu0 %v348
        %833 = vmatpush1.msra.mxu0 %v347
        %834 = vmatprep.subr.mxu0 %v352
        %835 = vmatpush1.msra.mxu0 %v351
        %836 = vmatprep.subr.mxu0 %v356
        %837 = vmatpush1.msra.mxu0 %v355
        %838 = vmatprep.subr.mxu0 %v360
        %839 = vmatpush1.msra.mxu0 %v359
        %840 = vmatprep.subr.mxu0 %v364
        %841 = vmatpush1.msra.mxu0 %v363
        %842 = vmatprep.subr.mxu0 %v368
        %843 = vmatpush1.msra.mxu0 %v367
        %844 = vmatprep.subr.mxu0 %v372
        %845 = vmatpush1.msra.mxu0 %v371
        %846 = vmatprep.subr.mxu0 %v376
        %847 = vmatpush1.msra.mxu0 %v375
        %848 = vmatprep.subr.mxu0 %v380
        %849 = vmatpush1.msra.mxu0 %v379
        %850 = vmatprep.subr.mxu0 %v384
        %851 = vmatpush1.msra.mxu0 %v383
        %852 = vmatprep.subr.mxu0 0.0
        %853 = vmatpush1.msra.mxu0 0.0
        %854 = vmatprep.subr.mxu0 0.0
        %855 = vmatpush1.msra.mxu0 0.0
        %856 = vmatprep.subr.mxu0 0.0
        %857 = vmatpush1.msra.mxu0 0.0
        %858 = vmatprep.subr.mxu0 0.0
        %859 = vmatpush1.msra.mxu0 0.0
        %860 = vmatprep.subr.mxu0 0.0
        %861 = vmatpush1.msra.mxu0 0.0
        %862 = vmatprep.subr.mxu0 0.0
        %863 = vmatpush1.msra.mxu0 0.0
        %864 = vmatprep.subr.mxu0 0.0
        %865 = vmatpush1.msra.mxu0 0.0
        %866 = vmatprep.subr.mxu0 0.0
        %867 = vmatpush1.msra.mxu0 0.0
        %868 = vmatprep.subr.mxu0 0.0
        %869 = vmatpush1.msra.mxu0 0.0
        %870 = vmatprep.subr.mxu0 0.0
        %871 = vmatpush1.msra.mxu0 0.0
        %872 = vmatprep.subr.mxu0 0.0
        %873 = vmatpush1.msra.mxu0 0.0
        %874 = vmatprep.subr.mxu0 0.0
        %875 = vmatpush1.msra.mxu0 0.0
        %876 = vmatprep.subr.mxu0 0.0
        %877 = vmatpush1.msra.mxu0 0.0
        %878 = vmatprep.subr.mxu0 0.0
        %879 = vmatpush1.msra.mxu0 0.0
        %880 = vmatprep.subr.mxu0 0.0
        %881 = vmatpush1.msra.mxu0 0.0
        %882 = vmatprep.subr.mxu0 0.0
        %883 = vmatpush1.msra.mxu0 0.0
        %884 = vmatprep.mubr.f32.mxu0 0.0
        %885 = vmatmul.mubr.f32.gmra.mrb[0].mxu0 %v796
        %v886 = vpop.f32.mrb[0].mxu0
        %v887 = vadd.f32 %v803, %v886
        %v888 = vpop.f32.mrb[0].mxu0
        %v889 = vadd.f32 %v807, %v888
        %890 = vmatprep.mubr.f32.mxu0 0.0
        %891 = vmatmul.mubr.f32.gmra.mrb[0].mxu0 %v798
        %v892 = vpop.f32.mrb[0].mxu0
        %v893 = vadd.f32 %v803, %v892
        %v894 = vpop.f32.mrb[0].mxu0
        %v895 = vadd.f32 %v807, %v894
        %896 = vdwg.mxu0
        %897 = vmatprep.subr.mxu0 %v326
        %898 = vmatpush1.msra.mxu0 %v325
        %899 = vmatprep.subr.mxu0 %v330
        %900 = vmatpush1.msra.mxu0 %v329
        %901 = vmatprep.subr.mxu0 %v334
        %902 = vmatpush1.msra.mxu0 %v333
        %903 = vmatprep.subr.mxu0 %v338
        %904 = vmatpush1.msra.mxu0 %v337
        %905 = vmatprep.subr.mxu0 %v342
        %906 = vmatpush1.msra.mxu0 %v341
        %907 = vmatprep.subr.mxu0 %v346
        %908 = vmatpush1.msra.mxu0 %v345
        %909 = vmatprep.subr.mxu0 %v350
        %910 = vmatpush1.msra.mxu0 %v349
        %911 = vmatprep.subr.mxu0 %v354
        %912 = vmatpush1.msra.mxu0 %v353
        %913 = vmatprep.subr.mxu0 %v358
        %914 = vmatpush1.msra.mxu0 %v357
        %915 = vmatprep.subr.mxu0 %v362
        %916 = vmatpush1.msra.mxu0 %v361
        %917 = vmatprep.subr.mxu0 %v366
        %918 = vmatpush1.msra.mxu0 %v365
        %919 = vmatprep.subr.mxu0 %v370
        %920 = vmatpush1.msra.mxu0 %v369
        %921 = vmatprep.subr.mxu0 %v374
        %922 = vmatpush1.msra.mxu0 %v373
        %923 = vmatprep.subr.mxu0 %v378
        %924 = vmatpush1.msra.mxu0 %v377
        %925 = vmatprep.subr.mxu0 %v382
        %926 = vmatpush1.msra.mxu0 %v381
        %927 = vmatprep.subr.mxu0 %v386
        %928 = vmatpush1.msra.mxu0 %v385
        %929 = vmatprep.subr.mxu0 0.0
        %930 = vmatpush1.msra.mxu0 0.0
        %931 = vmatprep.subr.mxu0 0.0
        %932 = vmatpush1.msra.mxu0 0.0
        %933 = vmatprep.subr.mxu0 0.0
        %934 = vmatpush1.msra.mxu0 0.0
        %935 = vmatprep.subr.mxu0 0.0
        %936 = vmatpush1.msra.mxu0 0.0
        %937 = vmatprep.subr.mxu0 0.0
        %938 = vmatpush1.msra.mxu0 0.0
        %939 = vmatprep.subr.mxu0 0.0
        %940 = vmatpush1.msra.mxu0 0.0
        %941 = vmatprep.subr.mxu0 0.0
        %942 = vmatpush1.msra.mxu0 0.0
        %943 = vmatprep.subr.mxu0 0.0
        %944 = vmatpush1.msra.mxu0 0.0
        %945 = vmatprep.subr.mxu0 0.0
        %946 = vmatpush1.msra.mxu0 0.0
        %947 = vmatprep.subr.mxu0 0.0
        %948 = vmatpush1.msra.mxu0 0.0
        %949 = vmatprep.subr.mxu0 0.0
        %950 = vmatpush1.msra.mxu0 0.0
        %951 = vmatprep.subr.mxu0 0.0
        %952 = vmatpush1.msra.mxu0 0.0
        %953 = vmatprep.subr.mxu0 0.0
        %954 = vmatpush1.msra.mxu0 0.0
        %955 = vmatprep.subr.mxu0 0.0
        %956 = vmatpush1.msra.mxu0 0.0
        %957 = vmatprep.subr.mxu0 0.0
        %958 = vmatpush1.msra.mxu0 0.0
        %959 = vmatprep.subr.mxu0 0.0
        %960 = vmatpush1.msra.mxu0 0.0
        %961 = vmatprep.mubr.f32.mxu0 0.0
        %962 = vmatmul.mubr.f32.gmra.mrb[0].mxu0 %v796
        %v963 = vpop.f32.mrb[0].mxu0
        %v964 = vadd.f32 %v811, %v963
        %v965 = vpop.f32.mrb[0].mxu0
        %v966 = vadd.f32 %v815, %v965
        %967 = vmatprep.mubr.f32.mxu0 0.0
        %968 = vmatmul.mubr.f32.gmra.mrb[0].mxu0 %v798
        %v969 = vpop.f32.mrb[0].mxu0
        %v970 = vadd.f32 %v811, %v969
        %v971 = vpop.f32.mrb[0].mxu0
        %v972 = vadd.f32 %v815, %v971
        %973 = vdwg.mxu0
        %v975 = vlaneseq
        %v976 = vshrl.u32 %v975, 7
        %v977 = vsub.s32 0, %v976
        %v978 = vrot.slane %v615, %v977
        %v979 = vlaneseq
        %v980 = vshrl.u32 %v979, 7
        %v981 = vsub.s32 1, %v980
        %v982 = vrot.slane %v615, %v981
        %v983 = vlaneseq
        %v984 = vshrl.u32 %v983, 7
        %v985 = vsub.s32 2, %v984
        %v986 = vrot.slane %v615, %v985
        %v987 = vlaneseq
        %v988 = vshrl.u32 %v987, 7
        %v989 = vsub.s32 3, %v988
        %v990 = vrot.slane %v615, %v989
        %vm995 = vcmask 261120
        %v997 = vsel %vm995, %v620, 0
        %v1000 = vsel %vm995, %v621, 0
        %1002 = vmatprep.subr.mxu0 %v570
        %1003 = vmatpush1.msra.mxu0 %v569
        %1004 = vmatprep.subr.mxu0 %v574
        %1005 = vmatpush1.msra.mxu0 %v573
        %1006 = vmatprep.subr.mxu0 %v578
        %1007 = vmatpush1.msra.mxu0 %v577
        %1008 = vmatprep.subr.mxu0 %v582
        %1009 = vmatpush1.msra.mxu0 %v581
        %1010 = vmatprep.subr.mxu0 0.0
        %1011 = vmatpush1.msra.mxu0 0.0
        %1012 = vmatprep.subr.mxu0 0.0
        %1013 = vmatpush1.msra.mxu0 0.0
        %1014 = vmatprep.subr.mxu0 0.0
        %1015 = vmatpush1.msra.mxu0 0.0
        %1016 = vmatprep.subr.mxu0 0.0
        %1017 = vmatpush1.msra.mxu0 0.0
        %1018 = vmatprep.subr.mxu0 0.0
        %1019 = vmatpush1.msra.mxu0 0.0
        %1020 = vmatprep.subr.mxu0 0.0
        %1021 = vmatpush1.msra.mxu0 0.0
        %1022 = vmatprep.subr.mxu0 0.0
        %1023 = vmatpush1.msra.mxu0 0.0
        %1024 = vmatprep.subr.mxu0 0.0
        %1025 = vmatpush1.msra.mxu0 0.0
        %1026 = vmatprep.subr.mxu0 0.0
        %1027 = vmatpush1.msra.mxu0 0.0
        %1028 = vmatprep.subr.mxu0 0.0
        %1029 = vmatpush1.msra.mxu0 0.0
        %1030 = vmatprep.subr.mxu0 0.0
        %1031 = vmatpush1.msra.mxu0 0.0
        %1032 = vmatprep.subr.mxu0 0.0
        %1033 = vmatpush1.msra.mxu0 0.0
        %1034 = vmatprep.subr.mxu0 0.0
        %1035 = vmatpush1.msra.mxu0 0.0
        %1036 = vmatprep.subr.mxu0 0.0
        %1037 = vmatpush1.msra.mxu0 0.0
        %1038 = vmatprep.subr.mxu0 0.0
        %1039 = vmatpush1.msra.mxu0 0.0
        %1040 = vmatprep.subr.mxu0 0.0
        %1041 = vmatpush1.msra.mxu0 0.0
        %1042 = vmatprep.subr.mxu0 0.0
        %1043 = vmatpush1.msra.mxu0 0.0
        %1044 = vmatprep.subr.mxu0 0.0
        %1045 = vmatpush1.msra.mxu0 0.0
        %1046 = vmatprep.subr.mxu0 0.0
        %1047 = vmatpush1.msra.mxu0 0.0
        %1048 = vmatprep.subr.mxu0 0.0
        %1049 = vmatpush1.msra.mxu0 0.0
        %1050 = vmatprep.subr.mxu0 0.0
        %1051 = vmatpush1.msra.mxu0 0.0
        %1052 = vmatprep.subr.mxu0 0.0
        %1053 = vmatpush1.msra.mxu0 0.0
        %1054 = vmatprep.subr.mxu0 0.0
        %1055 = vmatpush1.msra.mxu0 0.0
        %1056 = vmatprep.subr.mxu0 0.0
        %1057 = vmatpush1.msra.mxu0 0.0
        %1058 = vmatprep.subr.mxu0 0.0
        %1059 = vmatpush1.msra.mxu0 0.0
        %1060 = vmatprep.subr.mxu0 0.0
        %1061 = vmatpush1.msra.mxu0 0.0
        %1062 = vmatprep.subr.mxu0 0.0
        %1063 = vmatpush1.msra.mxu0 0.0
        %1064 = vmatprep.subr.mxu0 0.0
        %1065 = vmatpush1.msra.mxu0 0.0
        %1066 = vmatprep.mubr.f32.mxu0 0.0
        %1067 = vmatmul.mubr.f32.gmra.mrb[0].mxu0 %v997
        %v1068 = vpop.f32.mrb[0].mxu0
        %v1069 = vadd.f32 %v978, %v1068
        %v1070 = vpop.f32.mrb[0].mxu0
        %v1071 = vadd.f32 %v982, %v1070
        %1072 = vmatprep.mubr.f32.mxu0 0.0
        %1073 = vmatmul.mubr.f32.gmra.mrb[0].mxu0 %v1000
        %v1074 = vpop.f32.mrb[0].mxu0
        %v1075 = vadd.f32 %v978, %v1074
        %v1076 = vpop.f32.mrb[0].mxu0
        %v1077 = vadd.f32 %v982, %v1076
        %1078 = vdwg.mxu0
        %1079 = vmatprep.subr.mxu0 %v572
        %1080 = vmatpush1.msra.mxu0 %v571
        %1081 = vmatprep.subr.mxu0 %v576
        %1082 = vmatpush1.msra.mxu0 %v575
        %1083 = vmatprep.subr.mxu0 %v580
        %1084 = vmatpush1.msra.mxu0 %v579
        %1085 = vmatprep.subr.mxu0 %v584
        %1086 = vmatpush1.msra.mxu0 %v583
        %1087 = vmatprep.subr.mxu0 0.0
        %1088 = vmatpush1.msra.mxu0 0.0
        %1089 = vmatprep.subr.mxu0 0.0
        %1090 = vmatpush1.msra.mxu0 0.0
        %1091 = vmatprep.subr.mxu0 0.0
        %1092 = vmatpush1.msra.mxu0 0.0
        %1093 = vmatprep.subr.mxu0 0.0
        %1094 = vmatpush1.msra.mxu0 0.0
        %1095 = vmatprep.subr.mxu0 0.0
        %1096 = vmatpush1.msra.mxu0 0.0
        %1097 = vmatprep.subr.mxu0 0.0
        %1098 = vmatpush1.msra.mxu0 0.0
        %1099 = vmatprep.subr.mxu0 0.0
        %1100 = vmatpush1.msra.mxu0 0.0
        %1101 = vmatprep.subr.mxu0 0.0
        %1102 = vmatpush1.msra.mxu0 0.0
        %1103 = vmatprep.subr.mxu0 0.0
        %1104 = vmatpush1.msra.mxu0 0.0
        %1105 = vmatprep.subr.mxu0 0.0
        %1106 = vmatpush1.msra.mxu0 0.0
        %1107 = vmatprep.subr.mxu0 0.0
        %1108 = vmatpush1.msra.mxu0 0.0
        %1109 = vmatprep.subr.mxu0 0.0
        %1110 = vmatpush1.msra.mxu0 0.0
        %1111 = vmatprep.subr.mxu0 0.0
        %1112 = vmatpush1.msra.mxu0 0.0
        %1113 = vmatprep.subr.mxu0 0.0
        %1114 = vmatpush1.msra.mxu0 0.0
        %1115 = vmatprep.subr.mxu0 0.0
        %1116 = vmatpush1.msra.mxu0 0.0
        %1117 = vmatprep.subr.mxu0 0.0
        %1118 = vmatpush1.msra.mxu0 0.0
        %1119 = vmatprep.subr.mxu0 0.0
        %1120 = vmatpush1.msra.mxu0 0.0
        %1121 = vmatprep.subr.mxu0 0.0
        %1122 = vmatpush1.msra.mxu0 0.0
        %1123 = vmatprep.subr.mxu0 0.0
        %1124 = vmatpush1.msra.mxu0 0.0
        %1125 = vmatprep.subr.mxu0 0.0
        %1126 = vmatpush1.msra.mxu0 0.0
        %1127 = vmatprep.subr.mxu0 0.0
        %1128 = vmatpush1.msra.mxu0 0.0
        %1129 = vmatprep.subr.mxu0 0.0
        %1130 = vmatpush1.msra.mxu0 0.0
        %1131 = vmatprep.subr.mxu0 0.0
        %1132 = vmatpush1.msra.mxu0 0.0
        %1133 = vmatprep.subr.mxu0 0.0
        %1134 = vmatpush1.msra.mxu0 0.0
        %1135 = vmatprep.subr.mxu0 0.0
        %1136 = vmatpush1.msra.mxu0 0.0
        %1137 = vmatprep.subr.mxu0 0.0
        %1138 = vmatpush1.msra.mxu0 0.0
        %1139 = vmatprep.subr.mxu0 0.0
        %1140 = vmatpush1.msra.mxu0 0.0
        %1141 = vmatprep.subr.mxu0 0.0
        %1142 = vmatpush1.msra.mxu0 0.0
        %1143 = vmatprep.mubr.f32.mxu0 0.0
        %1144 = vmatmul.mubr.f32.gmra.mrb[0].mxu0 %v997
        %v1145 = vpop.f32.mrb[0].mxu0
        %v1146 = vadd.f32 %v986, %v1145
        %v1147 = vpop.f32.mrb[0].mxu0
        %v1148 = vadd.f32 %v990, %v1147
        %1149 = vmatprep.mubr.f32.mxu0 0.0
        %1150 = vmatmul.mubr.f32.gmra.mrb[0].mxu0 %v1000
        %v1151 = vpop.f32.mrb[0].mxu0
        %v1152 = vadd.f32 %v986, %v1151
        %v1153 = vpop.f32.mrb[0].mxu0
        %v1154 = vadd.f32 %v990, %v1153
        %1155 = vdwg.mxu0
        %v1157 = vlaneseq
        %v1158 = vshrl.u32 %v1157, 7
        %v1159 = vsub.s32 0, %v1158
        %v1160 = vrot.slane %v617, %v1159
        %v1161 = vlaneseq
        %v1162 = vshrl.u32 %v1161, 7
        %v1163 = vsub.s32 1, %v1162
        %v1164 = vrot.slane %v617, %v1163
        %v1165 = vlaneseq
        %v1166 = vshrl.u32 %v1165, 7
        %v1167 = vsub.s32 2, %v1166
        %v1168 = vrot.slane %v617, %v1167
        %v1169 = vlaneseq
        %v1170 = vshrl.u32 %v1169, 7
        %v1171 = vsub.s32 3, %v1170
        %v1172 = vrot.slane %v617, %v1171
        %1177 = vmatprep.subr.mxu0 %v586
        %1178 = vmatpush1.msra.mxu0 %v585
        %1179 = vmatprep.subr.mxu0 %v590
        %1180 = vmatpush1.msra.mxu0 %v589
        %1181 = vmatprep.subr.mxu0 %v594
        %1182 = vmatpush1.msra.mxu0 %v593
        %1183 = vmatprep.subr.mxu0 %v598
        %1184 = vmatpush1.msra.mxu0 %v597
        %1185 = vmatprep.subr.mxu0 0.0
        %1186 = vmatpush1.msra.mxu0 0.0
        %1187 = vmatprep.subr.mxu0 0.0
        %1188 = vmatpush1.msra.mxu0 0.0
        %1189 = vmatprep.subr.mxu0 0.0
        %1190 = vmatpush1.msra.mxu0 0.0
        %1191 = vmatprep.subr.mxu0 0.0
        %1192 = vmatpush1.msra.mxu0 0.0
        %1193 = vmatprep.subr.mxu0 0.0
        %1194 = vmatpush1.msra.mxu0 0.0
        %1195 = vmatprep.subr.mxu0 0.0
        %1196 = vmatpush1.msra.mxu0 0.0
        %1197 = vmatprep.subr.mxu0 0.0
        %1198 = vmatpush1.msra.mxu0 0.0
        %1199 = vmatprep.subr.mxu0 0.0
        %1200 = vmatpush1.msra.mxu0 0.0
        %1201 = vmatprep.subr.mxu0 0.0
        %1202 = vmatpush1.msra.mxu0 0.0
        %1203 = vmatprep.subr.mxu0 0.0
        %1204 = vmatpush1.msra.mxu0 0.0
        %1205 = vmatprep.subr.mxu0 0.0
        %1206 = vmatpush1.msra.mxu0 0.0
        %1207 = vmatprep.subr.mxu0 0.0
        %1208 = vmatpush1.msra.mxu0 0.0
        %1209 = vmatprep.subr.mxu0 0.0
        %1210 = vmatpush1.msra.mxu0 0.0
        %1211 = vmatprep.subr.mxu0 0.0
        %1212 = vmatpush1.msra.mxu0 0.0
        %1213 = vmatprep.subr.mxu0 0.0
        %1214 = vmatpush1.msra.mxu0 0.0
        %1215 = vmatprep.subr.mxu0 0.0
        %1216 = vmatpush1.msra.mxu0 0.0
        %1217 = vmatprep.subr.mxu0 0.0
        %1218 = vmatpush1.msra.mxu0 0.0
        %1219 = vmatprep.subr.mxu0 0.0
        %1220 = vmatpush1.msra.mxu0 0.0
        %1221 = vmatprep.subr.mxu0 0.0
        %1222 = vmatpush1.msra.mxu0 0.0
        %1223 = vmatprep.subr.mxu0 0.0
        %1224 = vmatpush1.msra.mxu0 0.0
        %1225 = vmatprep.subr.mxu0 0.0
        %1226 = vmatpush1.msra.mxu0 0.0
        %1227 = vmatprep.subr.mxu0 0.0
        %1228 = vmatpush1.msra.mxu0 0.0
        %1229 = vmatprep.subr.mxu0 0.0
        %1230 = vmatpush1.msra.mxu0 0.0
        %1231 = vmatprep.subr.mxu0 0.0
        %1232 = vmatpush1.msra.mxu0 0.0
        %1233 = vmatprep.subr.mxu0 0.0
        %1234 = vmatpush1.msra.mxu0 0.0
        %1235 = vmatprep.subr.mxu0 0.0
        %1236 = vmatpush1.msra.mxu0 0.0
        %1237 = vmatprep.subr.mxu0 0.0
        %1238 = vmatpush1.msra.mxu0 0.0
        %1239 = vmatprep.subr.mxu0 0.0
        %1240 = vmatpush1.msra.mxu0 0.0
        %1241 = vmatprep.mubr.f32.mxu0 0.0
        %1242 = vmatmul.mubr.f32.gmra.mrb[0].mxu0 %v997
        %v1243 = vpop.f32.mrb[0].mxu0
        %v1244 = vadd.f32 %v1160, %v1243
        %v1245 = vpop.f32.mrb[0].mxu0
        %v1246 = vadd.f32 %v1164, %v1245
        %1247 = vmatprep.mubr.f32.mxu0 0.0
        %1248 = vmatmul.mubr.f32.gmra.mrb[0].mxu0 %v1000
        %v1249 = vpop.f32.mrb[0].mxu0
        %v1250 = vadd.f32 %v1160, %v1249
        %v1251 = vpop.f32.mrb[0].mxu0
        %v1252 = vadd.f32 %v1164, %v1251
        %1253 = vdwg.mxu0
        %1254 = vmatprep.subr.mxu0 %v588
        %1255 = vmatpush1.msra.mxu0 %v587
        %1256 = vmatprep.subr.mxu0 %v592
        %1257 = vmatpush1.msra.mxu0 %v591
        %1258 = vmatprep.subr.mxu0 %v596
        %1259 = vmatpush1.msra.mxu0 %v595
        %1260 = vmatprep.subr.mxu0 %v600
        %1261 = vmatpush1.msra.mxu0 %v599
        %1262 = vmatprep.subr.mxu0 0.0
        %1263 = vmatpush1.msra.mxu0 0.0
        %1264 = vmatprep.subr.mxu0 0.0
        %1265 = vmatpush1.msra.mxu0 0.0
        %1266 = vmatprep.subr.mxu0 0.0
        %1267 = vmatpush1.msra.mxu0 0.0
        %1268 = vmatprep.subr.mxu0 0.0
        %1269 = vmatpush1.msra.mxu0 0.0
        %1270 = vmatprep.subr.mxu0 0.0
        %1271 = vmatpush1.msra.mxu0 0.0
        %1272 = vmatprep.subr.mxu0 0.0
        %1273 = vmatpush1.msra.mxu0 0.0
        %1274 = vmatprep.subr.mxu0 0.0
        %1275 = vmatpush1.msra.mxu0 0.0
        %1276 = vmatprep.subr.mxu0 0.0
        %1277 = vmatpush1.msra.mxu0 0.0
        %1278 = vmatprep.subr.mxu0 0.0
        %1279 = vmatpush1.msra.mxu0 0.0
        %1280 = vmatprep.subr.mxu0 0.0
        %1281 = vmatpush1.msra.mxu0 0.0
        %1282 = vmatprep.subr.mxu0 0.0
        %1283 = vmatpush1.msra.mxu0 0.0
        %1284 = vmatprep.subr.mxu0 0.0
        %1285 = vmatpush1.msra.mxu0 0.0
        %1286 = vmatprep.subr.mxu0 0.0
        %1287 = vmatpush1.msra.mxu0 0.0
        %1288 = vmatprep.subr.mxu0 0.0
        %1289 = vmatpush1.msra.mxu0 0.0
        %1290 = vmatprep.subr.mxu0 0.0
        %1291 = vmatpush1.msra.mxu0 0.0
        %1292 = vmatprep.subr.mxu0 0.0
        %1293 = vmatpush1.msra.mxu0 0.0
        %1294 = vmatprep.subr.mxu0 0.0
        %1295 = vmatpush1.msra.mxu0 0.0
        %1296 = vmatprep.subr.mxu0 0.0
        %1297 = vmatpush1.msra.mxu0 0.0
        %1298 = vmatprep.subr.mxu0 0.0
        %1299 = vmatpush1.msra.mxu0 0.0
        %1300 = vmatprep.subr.mxu0 0.0
        %1301 = vmatpush1.msra.mxu0 0.0
        %1302 = vmatprep.subr.mxu0 0.0
        %1303 = vmatpush1.msra.mxu0 0.0
        %1304 = vmatprep.subr.mxu0 0.0
        %1305 = vmatpush1.msra.mxu0 0.0
        %1306 = vmatprep.subr.mxu0 0.0
        %1307 = vmatpush1.msra.mxu0 0.0
        %1308 = vmatprep.subr.mxu0 0.0
        %1309 = vmatpush1.msra.mxu0 0.0
        %1310 = vmatprep.subr.mxu0 0.0
        %1311 = vmatpush1.msra.mxu0 0.0
        %1312 = vmatprep.subr.mxu0 0.0
        %1313 = vmatpush1.msra.mxu0 0.0
        %1314 = vmatprep.subr.mxu0 0.0
        %1315 = vmatpush1.msra.mxu0 0.0
        %1316 = vmatprep.subr.mxu0 0.0
        %1317 = vmatpush1.msra.mxu0 0.0
        %1318 = vmatprep.mubr.f32.mxu0 0.0
        %1319 = vmatmul.mubr.f32.gmra.mrb[0].mxu0 %v997
        %v1320 = vpop.f32.mrb[0].mxu0
        %v1321 = vadd.f32 %v1168, %v1320
        %v1322 = vpop.f32.mrb[0].mxu0
        %v1323 = vadd.f32 %v1172, %v1322
        %1324 = vmatprep.mubr.f32.mxu0 0.0
        %1325 = vmatmul.mubr.f32.gmra.mrb[0].mxu0 %v1000
        %v1326 = vpop.f32.mrb[0].mxu0
        %v1327 = vadd.f32 %v1168, %v1326
        %v1328 = vpop.f32.mrb[0].mxu0
        %v1329 = vadd.f32 %v1172, %v1328
        %1330 = vdwg.mxu0
        %v1332 = vlaneseq
        %v1333 = vshrl.u32 %v1332, 7
        %v1334 = vsub.s32 0, %v1333
        %v1335 = vrot.slane %v619, %v1334
        %v1336 = vlaneseq
        %v1337 = vshrl.u32 %v1336, 7
        %v1338 = vsub.s32 1, %v1337
        %v1339 = vrot.slane %v619, %v1338
        %1342 = vmatprep.subr.mxu0 %v602
        %1343 = vmatpush1.msra.mxu0 %v601
        %1344 = vmatprep.subr.mxu0 %v604
        %1345 = vmatpush1.msra.mxu0 %v603
        %1346 = vmatprep.subr.mxu0 %v606
        %1347 = vmatpush1.msra.mxu0 %v605
        %1348 = vmatprep.subr.mxu0 %v608
        %1349 = vmatpush1.msra.mxu0 %v607
        %1350 = vmatprep.subr.mxu0 0.0
        %1351 = vmatpush1.msra.mxu0 0.0
        %1352 = vmatprep.subr.mxu0 0.0
        %1353 = vmatpush1.msra.mxu0 0.0
        %1354 = vmatprep.subr.mxu0 0.0
        %1355 = vmatpush1.msra.mxu0 0.0
        %1356 = vmatprep.subr.mxu0 0.0
        %1357 = vmatpush1.msra.mxu0 0.0
        %1358 = vmatprep.subr.mxu0 0.0
        %1359 = vmatpush1.msra.mxu0 0.0
        %1360 = vmatprep.subr.mxu0 0.0
        %1361 = vmatpush1.msra.mxu0 0.0
        %1362 = vmatprep.subr.mxu0 0.0
        %1363 = vmatpush1.msra.mxu0 0.0
        %1364 = vmatprep.subr.mxu0 0.0
        %1365 = vmatpush1.msra.mxu0 0.0
        %1366 = vmatprep.subr.mxu0 0.0
        %1367 = vmatpush1.msra.mxu0 0.0
        %1368 = vmatprep.subr.mxu0 0.0
        %1369 = vmatpush1.msra.mxu0 0.0
        %1370 = vmatprep.subr.mxu0 0.0
        %1371 = vmatpush1.msra.mxu0 0.0
        %1372 = vmatprep.subr.mxu0 0.0
        %1373 = vmatpush1.msra.mxu0 0.0
        %1374 = vmatprep.subr.mxu0 0.0
        %1375 = vmatpush1.msra.mxu0 0.0
        %1376 = vmatprep.subr.mxu0 0.0
        %1377 = vmatpush1.msra.mxu0 0.0
        %1378 = vmatprep.subr.mxu0 0.0
        %1379 = vmatpush1.msra.mxu0 0.0
        %1380 = vmatprep.subr.mxu0 0.0
        %1381 = vmatpush1.msra.mxu0 0.0
        %1382 = vmatprep.subr.mxu0 0.0
        %1383 = vmatpush1.msra.mxu0 0.0
        %1384 = vmatprep.subr.mxu0 0.0
        %1385 = vmatpush1.msra.mxu0 0.0
        %1386 = vmatprep.subr.mxu0 0.0
        %1387 = vmatpush1.msra.mxu0 0.0
        %1388 = vmatprep.subr.mxu0 0.0
        %1389 = vmatpush1.msra.mxu0 0.0
        %1390 = vmatprep.subr.mxu0 0.0
        %1391 = vmatpush1.msra.mxu0 0.0
        %1392 = vmatprep.subr.mxu0 0.0
        %1393 = vmatpush1.msra.mxu0 0.0
        %1394 = vmatprep.subr.mxu0 0.0
        %1395 = vmatpush1.msra.mxu0 0.0
        %1396 = vmatprep.subr.mxu0 0.0
        %1397 = vmatpush1.msra.mxu0 0.0
        %1398 = vmatprep.subr.mxu0 0.0
        %1399 = vmatpush1.msra.mxu0 0.0
        %1400 = vmatprep.subr.mxu0 0.0
        %1401 = vmatpush1.msra.mxu0 0.0
        %1402 = vmatprep.subr.mxu0 0.0
        %1403 = vmatpush1.msra.mxu0 0.0
        %1404 = vmatprep.subr.mxu0 0.0
        %1405 = vmatpush1.msra.mxu0 0.0
        %1406 = vmatprep.mubr.f32.mxu0 0.0
        %1407 = vmatmul.mubr.f32.gmra.mrb[0].mxu0 %v997
        %v1408 = vpop.f32.mrb[0].mxu0
        %v1409 = vadd.f32 %v1335, %v1408
        %v1410 = vpop.f32.mrb[0].mxu0
        %v1411 = vadd.f32 %v1339, %v1410
        %1412 = vmatprep.mubr.f32.mxu0 0.0
        %1413 = vmatmul.mubr.f32.gmra.mrb[0].mxu0 %v1000
        %v1414 = vpop.f32.mrb[0].mxu0
        %v1415 = vadd.f32 %v1335, %v1414
        %v1416 = vpop.f32.mrb[0].mxu0
        %v1417 = vadd.f32 %v1339, %v1416
        %1418 = vdwg.mxu0
        %v1419 = vmul.f32 %v1069, %v1244
        %v1420 = vmul.f32 %v1071, %v1246
        %v1421 = vmul.f32 %v1146, %v1321
        %v1422 = vmul.f32 %v1148, %v1323
        %v1423 = vmul.f32 %v1075, %v1250
        %v1424 = vmul.f32 %v1077, %v1252
        %v1425 = vmul.f32 %v1152, %v1327
        %v1426 = vmul.f32 %v1154, %v1329
        %v1427 = vmul.f32 %v1419, %v887
        %v1428 = vmul.f32 %v1420, %v889
        %v1429 = vmul.f32 %v1421, %v964
        %v1430 = vmul.f32 %v1422, %v966
        %v1431 = vmul.f32 %v1423, %v893
        %v1432 = vmul.f32 %v1424, %v895
        %v1433 = vmul.f32 %v1425, %v970
        %v1434 = vmul.f32 %v1426, %v972
        %1435 = vmatprep.subr.mxu0 %v388
        %1436 = vmatpush1.msra.mxu0 %v387
        %1437 = vmatprep.subr.mxu0 %v390
        %1438 = vmatpush1.msra.mxu0 %v389
        %1439 = vmatprep.subr.mxu0 %v392
        %1440 = vmatpush1.msra.mxu0 %v391
        %1441 = vmatprep.subr.mxu0 %v394
        %1442 = vmatpush1.msra.mxu0 %v393
        %1443 = vmatprep.subr.mxu0 %v396
        %1444 = vmatpush1.msra.mxu0 %v395
        %1445 = vmatprep.subr.mxu0 %v398
        %1446 = vmatpush1.msra.mxu0 %v397
        %1447 = vmatprep.subr.mxu0 %v400
        %1448 = vmatpush1.msra.mxu0 %v399
        %1449 = vmatprep.subr.mxu0 %v402
        %1450 = vmatpush1.msra.mxu0 %v401
        %1451 = vmatprep.subr.mxu0 %v404
        %1452 = vmatpush1.msra.mxu0 %v403
        %1453 = vmatprep.subr.mxu0 %v406
        %1454 = vmatpush1.msra.mxu0 %v405
        %1455 = vmatprep.subr.mxu0 %v408
        %1456 = vmatpush1.msra.mxu0 %v407
        %1457 = vmatprep.subr.mxu0 %v410
        %1458 = vmatpush1.msra.mxu0 %v409
        %1459 = vmatprep.subr.mxu0 %v412
        %1460 = vmatpush1.msra.mxu0 %v411
        %1461 = vmatprep.subr.mxu0 %v414
        %1462 = vmatpush1.msra.mxu0 %v413
        %1463 = vmatprep.subr.mxu0 %v416
        %1464 = vmatpush1.msra.mxu0 %v415
        %1465 = vmatprep.subr.mxu0 %v418
        %1466 = vmatpush1.msra.mxu0 %v417
        %1467 = vmatprep.subr.mxu0 %v420
        %1468 = vmatpush1.msra.mxu0 %v419
        %1469 = vmatprep.subr.mxu0 %v422
        %1470 = vmatpush1.msra.mxu0 %v421
        %1471 = vmatprep.subr.mxu0 %v424
        %1472 = vmatpush1.msra.mxu0 %v423
        %1473 = vmatprep.subr.mxu0 %v426
        %1474 = vmatpush1.msra.mxu0 %v425
        %1475 = vmatprep.subr.mxu0 %v428
        %1476 = vmatpush1.msra.mxu0 %v427
        %1477 = vmatprep.subr.mxu0 %v430
        %1478 = vmatpush1.msra.mxu0 %v429
        %1479 = vmatprep.subr.mxu0 %v432
        %1480 = vmatpush1.msra.mxu0 %v431
        %1481 = vmatprep.subr.mxu0 %v434
        %1482 = vmatpush1.msra.mxu0 %v433
        %1483 = vmatprep.subr.mxu0 %v436
        %1484 = vmatpush1.msra.mxu0 %v435
        %1485 = vmatprep.subr.mxu0 %v438
        %1486 = vmatpush1.msra.mxu0 %v437
        %1487 = vmatprep.subr.mxu0 %v440
        %1488 = vmatpush1.msra.mxu0 %v439
        %1489 = vmatprep.subr.mxu0 %v442
        %1490 = vmatpush1.msra.mxu0 %v441
        %1491 = vmatprep.subr.mxu0 %v444
        %1492 = vmatpush1.msra.mxu0 %v443
        %1493 = vmatprep.subr.mxu0 %v446
        %1494 = vmatpush1.msra.mxu0 %v445
        %1495 = vmatprep.subr.mxu0 %v448
        %1496 = vmatpush1.msra.mxu0 %v447
        %1497 = vmatprep.subr.mxu0 %v450
        %1498 = vmatpush1.msra.mxu0 %v449
        %1499 = vmatprep.mubr.f32.mxu0 %v1428
        %1500 = vmatmul.mubr.f32.gmra.mrb[0].mxu0 %v1427
        %v1501 = vpop.f32.mrb[0].mxu0
        %v1502 = vadd.f32 %v1409, %v1501
        %v1503 = vpop.f32.mrb[0].mxu0
        %v1504 = vadd.f32 %v1411, %v1503
        %1505 = vmatprep.mubr.f32.mxu0 %v1432
        %1506 = vmatmul.mubr.f32.gmra.mrb[0].mxu0 %v1431
        %v1507 = vpop.f32.mrb[0].mxu0
        %v1508 = vadd.f32 %v1415, %v1507
        %v1509 = vpop.f32.mrb[0].mxu0
        %v1510 = vadd.f32 %v1417, %v1509
        %1511 = vdwg.mxu0
        %1512 = vmatprep.subr.mxu0 %v452
        %1513 = vmatpush1.msra.mxu0 %v451
        %1514 = vmatprep.subr.mxu0 %v454
        %1515 = vmatpush1.msra.mxu0 %v453
        %1516 = vmatprep.subr.mxu0 %v456
        %1517 = vmatpush1.msra.mxu0 %v455
        %1518 = vmatprep.subr.mxu0 %v458
        %1519 = vmatpush1.msra.mxu0 %v457
        %1520 = vmatprep.subr.mxu0 %v460
        %1521 = vmatpush1.msra.mxu0 %v459
        %1522 = vmatprep.subr.mxu0 %v462
        %1523 = vmatpush1.msra.mxu0 %v461
        %1524 = vmatprep.subr.mxu0 %v464
        %1525 = vmatpush1.msra.mxu0 %v463
        %1526 = vmatprep.subr.mxu0 %v466
        %1527 = vmatpush1.msra.mxu0 %v465
        %1528 = vmatprep.subr.mxu0 %v468
        %1529 = vmatpush1.msra.mxu0 %v467
        %1530 = vmatprep.subr.mxu0 %v470
        %1531 = vmatpush1.msra.mxu0 %v469
        %1532 = vmatprep.subr.mxu0 %v472
        %1533 = vmatpush1.msra.mxu0 %v471
        %1534 = vmatprep.subr.mxu0 %v474
        %1535 = vmatpush1.msra.mxu0 %v473
        %1536 = vmatprep.subr.mxu0 %v476
        %1537 = vmatpush1.msra.mxu0 %v475
        %1538 = vmatprep.subr.mxu0 %v478
        %1539 = vmatpush1.msra.mxu0 %v477
        %1540 = vmatprep.subr.mxu0 %v480
        %1541 = vmatpush1.msra.mxu0 %v479
        %1542 = vmatprep.subr.mxu0 %v482
        %1543 = vmatpush1.msra.mxu0 %v481
        %1544 = vmatprep.subr.mxu0 %v484
        %1545 = vmatpush1.msra.mxu0 %v483
        %1546 = vmatprep.subr.mxu0 %v486
        %1547 = vmatpush1.msra.mxu0 %v485
        %1548 = vmatprep.subr.mxu0 %v488
        %1549 = vmatpush1.msra.mxu0 %v487
        %1550 = vmatprep.subr.mxu0 %v490
        %1551 = vmatpush1.msra.mxu0 %v489
        %1552 = vmatprep.subr.mxu0 %v492
        %1553 = vmatpush1.msra.mxu0 %v491
        %1554 = vmatprep.subr.mxu0 %v494
        %1555 = vmatpush1.msra.mxu0 %v493
        %1556 = vmatprep.subr.mxu0 %v496
        %1557 = vmatpush1.msra.mxu0 %v495
        %1558 = vmatprep.subr.mxu0 %v498
        %1559 = vmatpush1.msra.mxu0 %v497
        %1560 = vmatprep.subr.mxu0 %v500
        %1561 = vmatpush1.msra.mxu0 %v499
        %1562 = vmatprep.subr.mxu0 %v502
        %1563 = vmatpush1.msra.mxu0 %v501
        %1564 = vmatprep.subr.mxu0 %v504
        %1565 = vmatpush1.msra.mxu0 %v503
        %1566 = vmatprep.subr.mxu0 %v506
        %1567 = vmatpush1.msra.mxu0 %v505
        %1568 = vmatprep.subr.mxu0 %v508
        %1569 = vmatpush1.msra.mxu0 %v507
        %1570 = vmatprep.subr.mxu0 %v510
        %1571 = vmatpush1.msra.mxu0 %v509
        %1572 = vmatprep.subr.mxu0 %v512
        %1573 = vmatpush1.msra.mxu0 %v511
        %1574 = vmatprep.subr.mxu0 %v514
        %1575 = vmatpush1.msra.mxu0 %v513
        %1576 = vmatprep.mubr.f32.mxu0 %v1430
        %1577 = vmatmul.mubr.f32.gmra.mrb[0].mxu0 %v1429
        %v1578 = vpop.f32.mrb[0].mxu0
        %v1579 = vadd.f32 %v1502, %v1578
        %v1580 = vpop.f32.mrb[0].mxu0
        %v1581 = vadd.f32 %v1504, %v1580
        %1582 = vmatprep.mubr.f32.mxu0 %v1434
        %1583 = vmatmul.mubr.f32.gmra.mrb[0].mxu0 %v1433
        %v1584 = vpop.f32.mrb[0].mxu0
        %v1585 = vadd.f32 %v1508, %v1584
        %v1586 = vpop.f32.mrb[0].mxu0
        %v1587 = vadd.f32 %v1510, %v1586
        %1588 = vdwg.mxu0
        %v1589 = vtanh.pop %v1579
        %v1590 = vtanh.pop %v1581
        %v1591 = vtanh.pop %v1585
        %v1592 = vtanh.pop %v1587
        %v1593 = vmul.f32 %v565, %v1589
        %v1594 = vmul.f32 %v566, %v1590
        %v1595 = vmul.f32 %v567, %v1591
        %v1596 = vmul.f32 %v568, %v1592
        %v1597 = vadd.f32 %v1593, %v1595
        %v1598 = vrot.slane %v1597, 4
        %v1599 = vadd.f32 %v1597, %v1598
        %v1600 = vrot.slane %v1599, 2
        %v1601 = vadd.f32 %v1599, %v1600
        %v1602 = vrot.slane %v1601, 1
        %v1603 = vadd.f32 %v1601, %v1602
        %v1604 = vadd.f32 %v1594, %v1596
        %v1605 = vrot.slane %v1604, 4
        %v1606 = vadd.f32 %v1604, %v1605
        %v1607 = vrot.slane %v1606, 2
        %v1608 = vadd.f32 %v1606, %v1607
        %v1609 = vrot.slane %v1608, 1
        %v1610 = vadd.f32 %v1608, %v1609
        %v1611 = vmul.f32 %v613, %v624
        %v1614 = vcombine.low %v1603, %v1610
        %v1616 = vunpack.c.l.s4 1966171168
        %v1617 = vunpack.c.0.s8 %v1616
        %v1618 = vlaneseq
        %v1619 = vshrl.u32 %v1618, 7
        %v1620 = vsub.s32 %v1617, %v1619
        %v1621 = vrot.slane %v1614, %v1620
        %v1623 = vunpack.c.l.s4 1966171168
        %v1624 = vunpack.c.0.s8 %v1623
        %v1625 = vlaneseq
        %v1626 = vshrl.u32 %v1625, 7
        %v1627 = vsub.s32 %v1624, %v1626
        %v1628 = vrot.slane %v1621, %v1627
        %v1630 = vadd.f32 %v1611, %v1628
        %v1631 = vlaneseq
        %vm1632 = vcmp.ge.s32.totalorder %v1631, 0
        %vm1633 = vcmp.lt.s32.totalorder %v1631, 256
        %vm1634 = vmand %vm1632, %vm1633
        %1635 = vst.msk [vmem:[%s317] sm:$0x3] %vm1634, %v1630
        %v1637 = vlaneseq
        %v1638 = vshrl.u32 %v1637, 7
        %v1639 = vsub.s32 0, %v1638
        %v1640 = vrot.slane %v1630, %v1639
        %v1641 = vlaneseq
        %v1642 = vshrl.u32 %v1641, 7
        %v1643 = vsub.s32 1, %v1642
        %v1644 = vrot.slane %v1630, %v1643
        %1647 = vmatprep.subr.mxu0 0.0
        %1648 = vmatpush1.msra.mxu0 %v515
        %1649 = vmatprep.subr.mxu0 0.0
        %1650 = vmatpush1.msra.mxu0 %v516
        %1651 = vmatprep.subr.mxu0 0.0
        %1652 = vmatpush1.msra.mxu0 %v517
        %1653 = vmatprep.subr.mxu0 0.0
        %1654 = vmatpush1.msra.mxu0 %v518
        %1655 = vmatprep.subr.mxu0 0.0
        %1656 = vmatpush1.msra.mxu0 %v519
        %1657 = vmatprep.subr.mxu0 0.0
        %1658 = vmatpush1.msra.mxu0 %v520
        %1659 = vmatprep.subr.mxu0 0.0
        %1660 = vmatpush1.msra.mxu0 %v521
        %1661 = vmatprep.subr.mxu0 0.0
        %1662 = vmatpush1.msra.mxu0 %v522
        %1663 = vmatprep.subr.mxu0 0.0
        %1664 = vmatpush1.msra.mxu0 %v523
        %1665 = vmatprep.subr.mxu0 0.0
        %1666 = vmatpush1.msra.mxu0 %v524
        %1667 = vmatprep.subr.mxu0 0.0
        %1668 = vmatpush1.msra.mxu0 %v525
        %1669 = vmatprep.subr.mxu0 0.0
        %1670 = vmatpush1.msra.mxu0 %v526
        %1671 = vmatprep.subr.mxu0 0.0
        %1672 = vmatpush1.msra.mxu0 %v527
        %1673 = vmatprep.subr.mxu0 0.0
        %1674 = vmatpush1.msra.mxu0 %v528
        %1675 = vmatprep.subr.mxu0 0.0
        %1676 = vmatpush1.msra.mxu0 %v529
        %1677 = vmatprep.subr.mxu0 0.0
        %1678 = vmatpush1.msra.mxu0 %v530
        %1679 = vmatprep.subr.mxu0 0.0
        %1680 = vmatpush1.msra.mxu0 %v531
        %1681 = vmatprep.subr.mxu0 0.0
        %1682 = vmatpush1.msra.mxu0 %v532
        %1683 = vmatprep.subr.mxu0 0.0
        %1684 = vmatpush1.msra.mxu0 %v533
        %1685 = vmatprep.subr.mxu0 0.0
        %1686 = vmatpush1.msra.mxu0 %v534
        %1687 = vmatprep.subr.mxu0 0.0
        %1688 = vmatpush1.msra.mxu0 %v535
        %1689 = vmatprep.subr.mxu0 0.0
        %1690 = vmatpush1.msra.mxu0 %v536
        %1691 = vmatprep.subr.mxu0 0.0
        %1692 = vmatpush1.msra.mxu0 %v537
        %1693 = vmatprep.subr.mxu0 0.0
        %1694 = vmatpush1.msra.mxu0 %v538
        %1695 = vmatprep.subr.mxu0 0.0
        %1696 = vmatpush1.msra.mxu0 %v539
        %1697 = vmatprep.subr.mxu0 0.0
        %1698 = vmatpush1.msra.mxu0 %v540
        %1699 = vmatprep.subr.mxu0 0.0
        %1700 = vmatpush1.msra.mxu0 %v541
        %1701 = vmatprep.subr.mxu0 0.0
        %1702 = vmatpush1.msra.mxu0 %v542
        %1703 = vmatprep.subr.mxu0 0.0
        %1704 = vmatpush1.msra.mxu0 %v543
        %1705 = vmatprep.subr.mxu0 0.0
        %1706 = vmatpush1.msra.mxu0 %v544
        %1707 = vmatprep.subr.mxu0 0.0
        %1708 = vmatpush1.msra.mxu0 %v545
        %1709 = vmatprep.subr.mxu0 0.0
        %1710 = vmatpush1.msra.mxu0 %v546
        %1711 = vmatprep.mubr.f32.mxu0 %v1644
        %1712 = vmatmul.mubr.f32.gmra.mrb[0].mxu0 %v1640
        %v1713 = vpop.f32.mrb[0].mxu0
        %v1714 = vadd.f32 0.0, %v1713
        %v1715 = vpop.f32.mrb[0].mxu0
        %1716 = vdwg.mxu0
        %v1717 = vmul.f32 %v1714, %v1714
        %1718 = vmatprep.subr.mxu0 0.0
        %1719 = vmatpush1.msra.mxu0 %v547
        %1720 = vmatprep.subr.mxu0 0.0
        %1721 = vmatpush1.msra.mxu0 %v548
        %1722 = vmatprep.subr.mxu0 0.0
        %1723 = vmatpush1.msra.mxu0 %v549
        %1724 = vmatprep.subr.mxu0 0.0
        %1725 = vmatpush1.msra.mxu0 %v550
        %1726 = vmatprep.subr.mxu0 0.0
        %1727 = vmatpush1.msra.mxu0 %v551
        %1728 = vmatprep.subr.mxu0 0.0
        %1729 = vmatpush1.msra.mxu0 %v552
        %1730 = vmatprep.subr.mxu0 0.0
        %1731 = vmatpush1.msra.mxu0 %v553
        %1732 = vmatprep.subr.mxu0 0.0
        %1733 = vmatpush1.msra.mxu0 %v554
        %1734 = vmatprep.subr.mxu0 0.0
        %1735 = vmatpush1.msra.mxu0 %v555
        %1736 = vmatprep.subr.mxu0 0.0
        %1737 = vmatpush1.msra.mxu0 %v556
        %1738 = vmatprep.subr.mxu0 0.0
        %1739 = vmatpush1.msra.mxu0 %v557
        %1740 = vmatprep.subr.mxu0 0.0
        %1741 = vmatpush1.msra.mxu0 %v558
        %1742 = vmatprep.subr.mxu0 0.0
        %1743 = vmatpush1.msra.mxu0 %v559
        %1744 = vmatprep.subr.mxu0 0.0
        %1745 = vmatpush1.msra.mxu0 %v560
        %1746 = vmatprep.subr.mxu0 0.0
        %1747 = vmatpush1.msra.mxu0 %v561
        %1748 = vmatprep.subr.mxu0 0.0
        %1749 = vmatpush1.msra.mxu0 %v562
        %1750 = vmatprep.subr.mxu0 0.0
        %1751 = vmatpush1.msra.mxu0 0.0
        %1752 = vmatprep.subr.mxu0 0.0
        %1753 = vmatpush1.msra.mxu0 0.0
        %1754 = vmatprep.subr.mxu0 0.0
        %1755 = vmatpush1.msra.mxu0 0.0
        %1756 = vmatprep.subr.mxu0 0.0
        %1757 = vmatpush1.msra.mxu0 0.0
        %1758 = vmatprep.subr.mxu0 0.0
        %1759 = vmatpush1.msra.mxu0 0.0
        %1760 = vmatprep.subr.mxu0 0.0
        %1761 = vmatpush1.msra.mxu0 0.0
        %1762 = vmatprep.subr.mxu0 0.0
        %1763 = vmatpush1.msra.mxu0 0.0
        %1764 = vmatprep.subr.mxu0 0.0
        %1765 = vmatpush1.msra.mxu0 0.0
        %1766 = vmatprep.subr.mxu0 0.0
        %1767 = vmatpush1.msra.mxu0 0.0
        %1768 = vmatprep.subr.mxu0 0.0
        %1769 = vmatpush1.msra.mxu0 0.0
        %1770 = vmatprep.subr.mxu0 0.0
        %1771 = vmatpush1.msra.mxu0 0.0
        %1772 = vmatprep.subr.mxu0 0.0
        %1773 = vmatpush1.msra.mxu0 0.0
        %1774 = vmatprep.subr.mxu0 0.0
        %1775 = vmatpush1.msra.mxu0 0.0
        %1776 = vmatprep.subr.mxu0 0.0
        %1777 = vmatpush1.msra.mxu0 0.0
        %1778 = vmatprep.subr.mxu0 0.0
        %1779 = vmatpush1.msra.mxu0 0.0
        %1780 = vmatprep.subr.mxu0 0.0
        %1781 = vmatpush1.msra.mxu0 0.0
        %1782 = vmatprep.mubr.f32.mxu0 0.0
        %1783 = vmatmul.mubr.f32.gmra.mrb[0].mxu0 %v1717
        %v1784 = vpop.f32.mrb[0].mxu0
        %v1785 = vadd.f32 1e-12, %v1784
        %v1786 = vpop.f32.mrb[0].mxu0
        %1787 = vdwg.mxu0
        %v1788 = vrsqrt.pop %v1785
        %v1789 = vmul.f32 %v1714, %v1788
        %1790 = vst [vmem:[%s310] sm:$0x1] %v1789
        %s1791 = sand.u32 %s134, 1
        %s1792 = scalar_lea.sflag [#allocation4], %s1791
        %s1793 = sand.u32 %s134, 1
        %s1794 = scalar_lea.vmem [#allocation8], %s1793
        %s1795 = sand.u32 %s160, 1
        %s1796 = scalar_lea.sflag [#allocation10], %s1795
        %s1797 = sand.u32 %s160, 1
        %s1798 = smul.addr %s1797, 2
        %s1799 = scalar_lea.vmem [#allocation9], %s1798
        // Predicated region
        $region49: #{spat_conv_forward.1} parent=35 // pred_check
          %p1800 = pneg %p144
        $region50: #{spat_conv_forward.1} parent=35 // pred_check_branch
          %1802 = sbr.rel (%p1800) target = $region52
        $region51: #{spat_conv_forward.1} parent=35 // pred_region
          %s1804 = ssub.s32 16, 16
          %1805 = vsyncadd %s1792, %s1804
          %s1806 = smul.addr %s27, 16
          %s1807 = scalar_lea.hbm %s4, %s1806
          %s1809 = sshll.u32 %s1794, 4
          %s1810 = int_to_ptr.vmem [resolvable:$true] %s1809
          %1812 = dma.vmem_to_hbm [thread:$0]  %s1810, 16, %s1807, %s1792
        $region52: #{spat_conv_forward.1} parent=35 // pred_fallthru
          _
        // Predicated region
        $region53: #{spat_conv_forward.1} parent=35 // pred_check
          %p1813 = pneg %p170
        $region54: #{spat_conv_forward.1} parent=35 // pred_check_branch
          %1815 = sbr.rel (%p1813) target = $region56
        $region55: #{spat_conv_forward.1} parent=35 // pred_region
          %s1817 = ssub.s32 32, 32
          %1818 = vsyncadd %s1796, %s1817
          %s1819 = smul.addr %s27, 2
          %s1820 = smul.addr %s1819, 16
          %s1821 = scalar_lea.hbm %s5, %s1820
          %s1823 = sshll.u32 %s1799, 4
          %s1824 = int_to_ptr.vmem [resolvable:$true] %s1823
          %1826 = dma.vmem_to_hbm [thread:$0]  %s1824, 32, %s1821, %s1796
        $region56: #{spat_conv_forward.1} parent=35 // pred_fallthru
          _
      $region36: #{spat_conv_forward.1} parent=5 // pred_fallthru
        _
      %p1827 = scmp.le.s32.totalorder 2, %s22
      // Predicated region
      $region57: #{spat_conv_forward.1} parent=5 // pred_check
        %p1828 = pneg %p1827
      $region58: #{spat_conv_forward.1} parent=5 // pred_check_branch
        %1830 = sbr.rel (%p1828) target = $region60
      $region59: #{spat_conv_forward.1} parent=5 // pred_region
        %s1831 = ssub.s32 %s22, 2
        // Predicated region
        $region61: #{spat_conv_forward.1} parent=59 // pred_check
          %p1832 = pneg %p150
        $region62: #{spat_conv_forward.1} parent=59 // pred_check_branch
          %1834 = sbr.rel (%p1832) target = $region64
        $region63: #{spat_conv_forward.1} parent=59 // pred_region
          %s1835 = sand.u32 %s135, 1
          %s1836 = scalar_lea.sflag [#allocation4], %s1835
          %s1837 = sand.u32 %s135, 1
          %s1838 = scalar_lea.vmem [#allocation8], %s1837
          %1839 = dma.done %s1836, 16
        $region64: #{spat_conv_forward.1} parent=59 // pred_fallthru
          _
        // Predicated region
        $region65: #{spat_conv_forward.1} parent=59 // pred_check
          %p1840 = pneg %p176
        $region66: #{spat_conv_forward.1} parent=59 // pred_check_branch
          %1842 = sbr.rel (%p1840) target = $region68
        $region67: #{spat_conv_forward.1} parent=59 // pred_region
          %s1843 = sand.u32 %s161, 1
          %s1844 = scalar_lea.sflag [#allocation10], %s1843
          %s1845 = sand.u32 %s161, 1
          %s1846 = smul.addr %s1845, 2
          %s1847 = scalar_lea.vmem [#allocation9], %s1846
          %1848 = dma.done %s1844, 32
        $region68: #{spat_conv_forward.1} parent=59 // pred_fallthru
          _
      $region60: #{spat_conv_forward.1} parent=5 // pred_fallthru
        _
    $region6: #{spat_conv_forward.1} parent=1 // loop_footer
      %s26 = sadd.s32 1, %s22
    $region7: #{spat_conv_forward.1} parent=1 // loop_footer_branch
      %21 = sbr.rel target = $region3
    $region8: #{spat_conv_forward.1} parent=1 // loop_exit
      _
    %1849 = vsyncpa [#allocation3], 1
    %s1850 = scalar_lea.sflag [#allocation3], 1
    %1851 = vsyncpa %s1850, 1
    %1852 = vsyncpa [#allocation6], 1
    %s1853 = scalar_lea.sflag [#allocation6], 1
    %1854 = vsyncpa %s1853, 1
    %1855 = vsyncpa [#allocation4], 1
    %s1856 = scalar_lea.sflag [#allocation4], 1
    %1857 = vsyncpa %s1856, 1
    %1858 = vsyncpa [#allocation10], 1
    %s1859 = scalar_lea.sflag [#allocation10], 1
    %1860 = vsyncpa %s1859, 1

</llo_original>
